<compile_context>
chip_gen: v7x
topology: tpu7x:2x2x1
jax: 0.10.0
libtpu: 0.0.40
codegen_flags: <defaults>
</compile_context>

<pallas_src>
import functools
import inspect

import jax
import jax.numpy as jnp
from jax.experimental import pallas as pl
from jax.experimental.pallas import tpu as pltpu

LN_EPS = 1e-5              # torch.nn.LayerNorm default
_INV_SQRT2 = 0.7071067811865476


# ---------------------------------------------------------------------------
# shared math helpers (used by both the kernel and the pure-JAX reference)
# ---------------------------------------------------------------------------
def _erf(x):
    # Abramowitz & Stegun 7.1.26 polynomial (max abs error ~1.5e-7): only exp/mul/add/div,
    # all of which lower cleanly in Mosaic.  Matches PyTorch's exact-erf GELU to ~1e-7.
    a1, a2, a3, a4, a5 = 0.254829592, -0.284496736, 1.421413741, -1.453152027, 1.061405429
    p = 0.3275911
    z = jnp.abs(x)
    t = 1.0 / (1.0 + p * z)
    poly = ((((a5 * t + a4) * t + a3) * t + a2) * t + a1) * t
    y = 1.0 - poly * jnp.exp(-z * z)
    return jnp.where(x >= 0, y, -y)


def _gelu_exact(x):
    # PyTorch nn.GELU default (erf form)
    return 0.5 * x * (1.0 + _erf(x * _INV_SQRT2))


def _layernorm(x, w, b):
    mu = jnp.mean(x, axis=-1, keepdims=True)
    xc = x - mu
    var = jnp.mean(xc * xc, axis=-1, keepdims=True)
    return xc * jax.lax.rsqrt(var + LN_EPS) * w + b


def _bf16(x):
    return x.astype(jnp.bfloat16)


# ---------------------------------------------------------------------------
# BlockSpec helpers
# ---------------------------------------------------------------------------
def _supports_buffered_1():
    try:
        return ("pipeline_mode" in inspect.signature(pl.BlockSpec).parameters
                and hasattr(pl, "Buffered"))
    except (TypeError, ValueError):
        return False


_HAS_BUFFERED = _supports_buffered_1()


def _const_spec(shape):
    # Constant-index (grid-invariant) weight: single-buffer it when the API allows.
    nd = len(shape)
    idx = lambda bt, l, _nd=nd: (0,) * _nd
    if _HAS_BUFFERED:
        try:
            return pl.BlockSpec(shape, idx, pipeline_mode=pl.Buffered(1))
        except Exception:
            pass
    return pl.BlockSpec(shape, idx)


def _layer_spec(shape):
    # Layer-stacked weight (L, d1, d2): stream one layer per grid step along the L axis.
    nd = len(shape)
    return pl.BlockSpec((1,) + tuple(shape[1:]),
                        lambda bt, l, _nd=nd: (l,) + (0,) * (_nd - 1))


def _pick_b_tile(batch, t_rows):
    # Aim for >=~256 rows per matmul M while keeping >=2 grid steps on the batch axis
    # so dimension_semantics=("parallel", ...) can feed both v7x TensorCores.
    target = max(1, 256 // max(t_rows, 1))
    divisors = [d for d in range(1, batch + 1) if batch % d == 0]
    b_tile = max([d for d in divisors if d <= target] or [1])
    if b_tile == batch and batch > 1:
        b_tile = max(d for d in divisors if d < batch)
    return b_tile


def _vmem_budget_bytes():
    # Generation-aware VMEM budget: leave headroom on v7x (64 MiB physical per TC),
    # exploit the larger 128 MiB VMEM on v5e/v6e.
    try:
        cap = pltpu.get_tpu_info().vmem_capacity_bytes
    except Exception:
        cap = 64 * 1024 * 1024
    return int(min(max(cap - 16 * 1024 * 1024, 32 * 1024 * 1024), 100 * 1024 * 1024))


# ---------------------------------------------------------------------------
# fused kernel body (one grid step == one (batch-tile, layer) pair)
# ---------------------------------------------------------------------------
def _jepa_fused_kernel(
    num_heads, b_tile, num_layers,
    # per-batch-tile activation blocks
    ctx_ref, pe_ref,
    # global weights
    pred_w_ref, pred_b_ref, mask_tok_ref,
    # per-layer weights (one layer resident per grid step)
    ln1w_ref, ln1b_ref, wq_ref, wkv_ref, wp_ref, bp_ref,
    ln2w_ref, ln2b_ref, w1_ref, b1_ref, w2_ref, b2_ref,
    # global weights (tail of the network)
    norm_w_ref, norm_b_ref, proj_w_ref, proj_b_ref,
    # output
    o_ref,
    # scratch carried across the L grid axis
    ctx_scr, x_scr,
):
    l_idx = pl.program_id(1)
    E = wq_ref.shape[-1]
    H = num_heads
    dh = E // H
    scale = dh ** -0.5
    T = pe_ref.shape[1]
    Nc = ctx_ref.shape[1]
    R = b_tile * T          # rows for target tokens
    Rc = b_tile * Nc        # rows for context tokens
    Din = ctx_ref.shape[-1]

    # ---- layer 0: embed the context once (bf16, reused by every layer) and init x
    @pl.when(l_idx == 0)
    def _init():
        ctx_in = _bf16(ctx_ref[...].reshape(Rc, Din))
        ctx = jnp.dot(ctx_in, pred_w_ref[...],
                      preferred_element_type=jnp.float32) + pred_b_ref[...]      # (Rc, E)
        ctx_scr[...] = _bf16(ctx)
        x_scr[...] = pe_ref[...].reshape(R, E) + mask_tok_ref[...]               # (R, E) f32

    x = x_scr[...]                     # (R, E) f32, carried across the L axis
    ctx_bf = ctx_scr[...]              # (Rc, E) bf16

    # ---- cross attention: x + proj(MHA(LN(x), ctx, ctx)) -----------------------------
    xn = _layernorm(x, ln1w_ref[0], ln1b_ref[0])
    # big-M projections: all B_TILE*T (resp. B_TILE*Nc) rows in one MXU pass
    q = jnp.dot(_bf16(xn), wq_ref[0], preferred_element_type=jnp.float32) * scale   # (R, E)
    kv = jnp.dot(ctx_bf, wkv_ref[0], preferred_element_type=jnp.float32)            # (Rc, 2E)
    q_bf, kv_bf = _bf16(q), _bf16(kv)

    wp_l = wp_ref[0]                   # (E, E) bf16
    attn_proj = jnp.zeros((R, E), jnp.float32)
    for h in range(H):
        # contiguous per-head lane slabs straight from the matmul outputs (no stack/concat)
        qh = q_bf[:, h * dh:(h + 1) * dh].reshape(b_tile, T, dh)
        kh = kv_bf[:, h * dh:(h + 1) * dh].reshape(b_tile, Nc, dh)
        vh = kv_bf[:, E + h * dh:E + (h + 1) * dh].reshape(b_tile, Nc, dh)

        s = jax.lax.dot_general(qh, kh, (((2,), (2,)), ((0,), (0,))),
                                preferred_element_type=jnp.float32)                 # (bt, T, Nc)
        s = s - jnp.max(s, axis=-1, keepdims=True)
        p = jnp.exp(s)
        p = p * pl.reciprocal(jnp.sum(p, axis=-1, keepdims=True), approx=True)
        oh = jax.lax.dot_general(_bf16(p), vh, (((2,), (1,)), ((0,), (0,))),
                                 preferred_element_type=jnp.float32)                # (bt, T, dh)

        # project each head directly: sum_h oh @ wp[h*dh:(h+1)*dh, :] == concat(oh) @ wp
        attn_proj = attn_proj + jnp.dot(_bf16(oh.reshape(R, dh)),
                                        wp_l[h * dh:(h + 1) * dh, :],
                                        preferred_element_type=jnp.float32)
    x = x + attn_proj + bp_ref[0]

    # ---- MLP: x + W2(GELU(W1(LN(x)))) --------------------------------------------------
    xn2 = _layernorm(x, ln2w_ref[0], ln2b_ref[0])
    h1 = jnp.dot(_bf16(xn2), w1_ref[0], preferred_element_type=jnp.float32) + b1_ref[0]
    h1 = _gelu_exact(h1)
    x = x + jnp.dot(_bf16(h1), w2_ref[0], preferred_element_type=jnp.float32) + b2_ref[0]

    x_scr[...] = x

    # ---- last layer: projector_embed(norm(x)) into a lane-dense padded slab -------------
    @pl.when(l_idx == num_layers - 1)
    def _final():
        xnf = _layernorm(x, norm_w_ref[...], norm_b_ref[...])
        out = jnp.dot(_bf16(xnf), proj_w_ref[...],
                      preferred_element_type=jnp.float32) + proj_b_ref[...]          # (R, Dpad)
        o_ref[...] = out.reshape(o_ref.shape)


# ---------------------------------------------------------------------------
# pallas_call wrapper (whole forward = one kernel launch)
# ---------------------------------------------------------------------------
def jepa_predictor_forward(params, context_emb, target_masks, num_heads):
    B, Nc, Din = context_emb.shape
    E = params["mask_token"].shape[-1]
    T = target_masks.shape[0]
    L = params["wq"].shape[0]
    assert E % num_heads == 0

    # glue: positional-embedding gather + 't b c -> b t c' transpose
    # TODO(synk): fold this gather into the kernel via PrefetchScalarGridSpec + pl.Element.
    pe = params["pos_embedding"][:, 0, :][target_masks]              # (T, B, E)
    pe = jnp.transpose(pe, (1, 0, 2)).astype(jnp.float32)            # (B, T, E)

    # lane-dense output slab: pad the projector to a multiple of 128 output channels
    Dpad = ((Din + 127) // 128) * 128
    proj_w_p = jnp.zeros((E, Dpad), jnp.bfloat16).at[:, :Din].set(params["proj_w"])
    proj_b_p = jnp.zeros((1, Dpad), jnp.float32).at[:, :Din].set(params["proj_b"])

    b_tile = _pick_b_tile(B, T)
    nbt = B // b_tile

    global_pre = [params["pred_w"], params["pred_b"], params["mask_token"][0]]
    layer_ws = [params["ln1_w"], params["ln1_b"], params["wq"], params["wkv"],
                params["wp"], params["bp"], params["ln2_w"], params["ln2_b"],
                params["w1"], params["b1"], params["w2"], params["b2"]]
    global_post = [params["norm_w"], params["norm_b"], proj_w_p, proj_b_p]

    in_specs = (
        [pl.BlockSpec((b_tile, Nc, Din), lambda bt, l: (bt, 0, 0)),   # context_emb tile
         pl.BlockSpec((b_tile, T, E), lambda bt, l: (bt, 0, 0))]      # gathered pos embeddings
        + [_const_spec(w.shape) for w in global_pre]
        + [_layer_spec(w.shape) for w in layer_ws]
        + [_const_spec(w.shape) for w in global_post]
    )

    out_padded = pl.pallas_call(
        functools.partial(_jepa_fused_kernel, num_heads, b_tile, L),
        out_shape=jax.ShapeDtypeStruct((B, T, Dpad), jnp.float32),
        grid=(nbt, L),                                     # batch tiles (parallel) x layers (arbitrary)
        in_specs=in_specs,
        out_specs=pl.BlockSpec((b_tile, T, Dpad), lambda bt, l: (bt, 0, 0)),
        scratch_shapes=[
            pltpu.VMEM((b_tile * Nc, E), jnp.bfloat16),    # embedded context, reused by every layer
            pltpu.VMEM((b_tile * T, E), jnp.float32),      # activation x carried across the L axis
        ],
        compiler_params=pltpu.CompilerParams(
            dimension_semantics=("parallel", "arbitrary"),
            vmem_limit_bytes=_vmem_budget_bytes(),
        ),
    )(context_emb, pe, *global_pre, *layer_ws, *global_post)
    return out_padded[..., :Din]


# ---------------------------------------------------------------------------
# deterministic parameter init (synthetic; mirrors module __init__ shapes)
# ---------------------------------------------------------------------------
def init_params(key, n_patch_tokens, input_dim, emb_dim, num_layer, num_head, mlp_ratio=4.0):
    hidden = int(emb_dim * mlp_ratio)
    keys = iter(jax.random.split(key, 16))

    def nrm(shape, dtype=jnp.bfloat16, std=0.02):
        return (std * jax.random.normal(next(keys), shape)).astype(dtype)

    zeros = lambda s: jnp.zeros(s, jnp.float32)
    ones = lambda s: jnp.ones(s, jnp.float32)
    L, E, Hd = num_layer, emb_dim, hidden

    return dict(
        mask_token=nrm((1, 1, E), dtype=jnp.float32),
        pos_embedding=nrm((n_patch_tokens, 1, E), dtype=jnp.float32),
        # matmul weights stored in bf16 (MXU operands); biases / LN params stay f32
        pred_w=nrm((input_dim, E)), pred_b=zeros((1, E)),
        proj_w=nrm((E, input_dim)), proj_b=zeros((1, input_dim)),
        norm_w=ones((1, E)), norm_b=zeros((1, E)),
        # per-layer weights stacked along a leading layer axis (streamed via the L grid axis)
        ln1_w=ones((L, 1, E)), ln1_b=zeros((L, 1, E)),
        wq=nrm((L, E, E)),              # cyto_dl CrossAttention uses qkv_bias=False -> no bq/bkv
        wkv=nrm((L, E, 2 * E)),         # fused k/v projection
        wp=nrm((L, E, E)), bp=zeros((L, 1, E)),
        ln2_w=ones((L, 1, E)), ln2_b=zeros((L, 1, E)),
        w1=nrm((L, E, Hd)), b1=zeros((L, 1, Hd)),
        w2=nrm((L, Hd, E)), b2=zeros((L, 1, E)),
    )


# ---------------------------------------------------------------------------
# pure-JAX reference (all-f32 math with the same bf16-quantised weights)
# ---------------------------------------------------------------------------
def _ref_ln(x, w, b):
    mu = x.mean(-1, keepdims=True)
    var = ((x - mu) ** 2).mean(-1, keepdims=True)
    return (x - mu) / jnp.sqrt(var + LN_EPS) * w + b


def reference_forward(params, context_emb, target_masks, num_heads):
    f32 = lambda a: a.astype(jnp.float32)
    ctx = context_emb @ f32(params["pred_w"]) + params["pred_b"]
    E = params["mask_token"].shape[-1]
    pe = params["pos_embedding"][:, 0, :][target_masks]
    x = jnp.transpose(params["mask_token"].reshape(1, 1, E) + pe, (1, 0, 2))
    B, T, _ = x.shape
    Nc = ctx.shape[1]
    dh = E // num_heads
    L = params["wq"].shape[0]
    for l in range(L):
        xn = _ref_ln(x, params["ln1_w"][l], params["ln1_b"][l])
        q = xn @ f32(params["wq"][l])
        kv = ctx @ f32(params["wkv"][l])
        k, v = kv[..., :E], kv[..., E:]
        q = q.reshape(B, T, num_heads, dh).transpose(0, 2, 1, 3)
        k = k.reshape(B, Nc, num_heads, dh).transpose(0, 2, 1, 3)
        v = v.reshape(B, Nc, num_heads, dh).transpose(0, 2, 1, 3)
        attn = jax.nn.softmax((q @ jnp.swapaxes(k, -1, -2)) * (dh ** -0.5), axis=-1)
        o = (attn @ v).transpose(0, 2, 1, 3).reshape(B, T, E)
        x = x + (o @ f32(params["wp"][l]) + params["bp"][l])
        xn2 = _ref_ln(x, params["ln2_w"][l], params["ln2_b"][l])
        h = _gelu_exact(xn2 @ f32(params["w1"][l]) + params["b1"][l])
        x = x + (h @ f32(params["w2"][l]) + params["b2"][l])
    xn = _ref_ln(x, params["norm_w"], params["norm_b"])
    return xn @ f32(params["proj_w"]) + params["proj_b"]


# ---------------------------------------------------------------------------
# main
# ---------------------------------------------------------------------------
if __name__ == "__main__":
    B, N_CTX, T = 2, 8, 4
    INPUT_DIM, EMB_DIM = 24, 32
    NUM_LAYER, NUM_HEAD = 2, 4
    NUM_PATCHES = (4, 4)          # spatial_dims=2 -> 16 patch tokens
    n_tokens = NUM_PATCHES[0] * NUM_PATCHES[1]

    key = jax.random.PRNGKey(0)
    kp, kx, km = jax.random.split(key, 3)
    params = init_params(kp, n_tokens, INPUT_DIM, EMB_DIM, NUM_LAYER, NUM_HEAD)
    context_emb = jax.random.normal(kx, (B, N_CTX, INPUT_DIM), dtype=jnp.float32)
    target_masks = jax.random.randint(km, (T, B), 0, n_tokens, dtype=jnp.int32)

    fwd = jax.jit(jepa_predictor_forward, static_argnums=(3,))
    out = jax.block_until_ready(fwd(params, context_emb, target_masks, NUM_HEAD))
    assert out.shape == (B, T, INPUT_DIM), out.shape

    ref = jax.block_until_ready(reference_forward(params, context_emb, target_masks, NUM_HEAD))
    max_err = float(jnp.max(jnp.abs(out - ref)))
    assert jnp.all(jnp.isfinite(out)), "non-finite output"
    # tolerance covers bf16 MXU operands + approx softmax reciprocal vs the all-f32 reference
    assert max_err < 2e-2, f"mismatch vs reference: {max_err}"

    print("KERNEL_OK")
</pallas_src>

<mosaic_0001>
module attributes {stable_mosaic.version = 11 : i64} {
  func.func @_jepa_fused_kernel(%arg0: i32, %arg1: i32, %arg2: memref<1x8x24xf32, #tpu.memory_space<vmem>>, %arg3: memref<1x4x32xf32, #tpu.memory_space<vmem>>, %arg4: memref<24x32xbf16, #tpu.memory_space<vmem>>, %arg5: memref<1x32xf32, #tpu.memory_space<vmem>>, %arg6: memref<1x32xf32, #tpu.memory_space<vmem>>, %arg7: memref<1x1x32xf32, #tpu.memory_space<vmem>>, %arg8: memref<1x1x32xf32, #tpu.memory_space<vmem>>, %arg9: memref<1x32x32xbf16, #tpu.memory_space<vmem>>, %arg10: memref<1x32x64xbf16, #tpu.memory_space<vmem>>, %arg11: memref<1x32x32xbf16, #tpu.memory_space<vmem>>, %arg12: memref<1x1x32xf32, #tpu.memory_space<vmem>>, %arg13: memref<1x1x32xf32, #tpu.memory_space<vmem>>, %arg14: memref<1x1x32xf32, #tpu.memory_space<vmem>>, %arg15: memref<1x32x128xbf16, #tpu.memory_space<vmem>>, %arg16: memref<1x1x128xf32, #tpu.memory_space<vmem>>, %arg17: memref<1x128x32xbf16, #tpu.memory_space<vmem>>, %arg18: memref<1x1x32xf32, #tpu.memory_space<vmem>>, %arg19: memref<1x32xf32, #tpu.memory_space<vmem>>, %arg20: memref<1x32xf32, #tpu.memory_space<vmem>>, %arg21: memref<32x128xbf16, #tpu.memory_space<vmem>>, %arg22: memref<1x128xf32, #tpu.memory_space<vmem>>, %arg23: memref<1x4x128xf32, #tpu.memory_space<vmem>>, %arg24: memref<8x32xbf16, #tpu.memory_space<vmem>>, %arg25: memref<4x32xf32, #tpu.memory_space<vmem>>) attributes {dimension_semantics = [#tpu.dimension_semantics<parallel>, #tpu.dimension_semantics<arbitrary>], iteration_bounds = array<i64: 2, 2>, scalar_prefetch = 0 : i64, scratch_operands = 2 : i64, tpu.core_type = #tpu.core_type<tc>, window_params = [{transform_indices = @transform_0, window_bounds = array<i64: 1, 8, 24>}, {transform_indices = @transform_1, window_bounds = array<i64: 1, 4, 32>}, {pipeline_mode = #tpu.pipeline_mode<synchronous>, transform_indices = @transform_2, window_bounds = array<i64: 24, 32>}, {pipeline_mode = #tpu.pipeline_mode<synchronous>, transform_indices = @transform_3, window_bounds = array<i64: 1, 32>}, {pipeline_mode = #tpu.pipeline_mode<synchronous>, transform_indices = @transform_4, window_bounds = array<i64: 1, 32>}, {transform_indices = @transform_5, window_bounds = array<i64: 1, 1, 32>}, {transform_indices = @transform_6, window_bounds = array<i64: 1, 1, 32>}, {transform_indices = @transform_7, window_bounds = array<i64: 1, 32, 32>}, {transform_indices = @transform_8, window_bounds = array<i64: 1, 32, 64>}, {transform_indices = @transform_9, window_bounds = array<i64: 1, 32, 32>}, {transform_indices = @transform_10, window_bounds = array<i64: 1, 1, 32>}, {transform_indices = @transform_11, window_bounds = array<i64: 1, 1, 32>}, {transform_indices = @transform_12, window_bounds = array<i64: 1, 1, 32>}, {transform_indices = @transform_13, window_bounds = array<i64: 1, 32, 128>}, {transform_indices = @transform_14, window_bounds = array<i64: 1, 1, 128>}, {transform_indices = @transform_15, window_bounds = array<i64: 1, 128, 32>}, {transform_indices = @transform_16, window_bounds = array<i64: 1, 1, 32>}, {pipeline_mode = #tpu.pipeline_mode<synchronous>, transform_indices = @transform_17, window_bounds = array<i64: 1, 32>}, {pipeline_mode = #tpu.pipeline_mode<synchronous>, transform_indices = @transform_18, window_bounds = array<i64: 1, 32>}, {pipeline_mode = #tpu.pipeline_mode<synchronous>, transform_indices = @transform_19, window_bounds = array<i64: 32, 128>}, {pipeline_mode = #tpu.pipeline_mode<synchronous>, transform_indices = @transform_20, window_bounds = array<i64: 1, 128>}, {transform_indices = @transform_21, window_bounds = array<i64: 1, 4, 128>}]} {
    %c0_i32 = arith.constant 0 : i32
    %0 = arith.cmpi eq, %arg1, %c0_i32 : i32
    %1 = arith.extui %0 : i1 to i32
    %c0_i32_0 = arith.constant 0 : i32
    %2 = arith.cmpi ne, %1, %c0_i32_0 : i32
    scf.if %2 {
      %c0_93 = arith.constant 0 : index
      %c0_94 = arith.constant 0 : index
      %c0_95 = arith.constant 0 : index
      %229 = vector.load %arg2[%c0_93, %c0_94, %c0_95] : memref<1x8x24xf32, #tpu.memory_space<vmem>>, vector<1x8x24xf32>
      %230 = vector.shape_cast %229 : vector<1x8x24xf32> to vector<8x24xf32>
      %231 = arith.truncf %230 : vector<8x24xf32> to vector<8x24xbf16>
      %c0_96 = arith.constant 0 : index
      %c0_97 = arith.constant 0 : index
      %232 = vector.load %arg4[%c0_96, %c0_97] : memref<24x32xbf16, #tpu.memory_space<vmem>>, vector<24x32xbf16>
      %cst_98 = arith.constant dense<0.000000e+00> : vector<8x32xf32>
      %233 = tpu.matmul %231, %232, %cst_98 {dimension_numbers = #tpu.dot_dimension_numbers<[1], [0], [0], [1], [0, 0, 1, 1], [], []>} : vector<8x24xbf16>, vector<24x32xbf16>, vector<8x32xf32> -> vector<8x32xf32>
      %c0_99 = arith.constant 0 : index
      %c0_100 = arith.constant 0 : index
      %234 = vector.load %arg5[%c0_99, %c0_100] : memref<1x32xf32, #tpu.memory_space<vmem>>, vector<1x32xf32>
      %235 = vector.broadcast %234 : vector<1x32xf32> to vector<8x32xf32>
      %236 = arith.addf %233, %235 : vector<8x32xf32>
      %237 = arith.truncf %236 : vector<8x32xf32> to vector<8x32xbf16>
      %c0_101 = arith.constant 0 : index
      %c0_102 = arith.constant 0 : index
      %238 = vector.load %arg24[%c0_101, %c0_102] : memref<8x32xbf16, #tpu.memory_space<vmem>>, vector<8x32xbf16>
      tpu.vector_store %arg24[%c0_101, %c0_102], %237 {strides = array<i32>} : memref<8x32xbf16, #tpu.memory_space<vmem>>, vector<8x32xbf16>,
      %c0_103 = arith.constant 0 : index
      %c0_104 = arith.constant 0 : index
      %c0_105 = arith.constant 0 : index
      %239 = vector.load %arg3[%c0_103, %c0_104, %c0_105] : memref<1x4x32xf32, #tpu.memory_space<vmem>>, vector<1x4x32xf32>
      %240 = vector.shape_cast %239 : vector<1x4x32xf32> to vector<4x32xf32>
      %c0_106 = arith.constant 0 : index
      %c0_107 = arith.constant 0 : index
      %241 = vector.load %arg6[%c0_106, %c0_107] : memref<1x32xf32, #tpu.memory_space<vmem>>, vector<1x32xf32>
      %242 = vector.broadcast %241 : vector<1x32xf32> to vector<4x32xf32>
      %243 = arith.addf %240, %242 : vector<4x32xf32>
      %c0_108 = arith.constant 0 : index
      %c0_109 = arith.constant 0 : index
      %244 = vector.load %arg25[%c0_108, %c0_109] : memref<4x32xf32, #tpu.memory_space<vmem>>, vector<4x32xf32>
      tpu.vector_store %arg25[%c0_108, %c0_109], %243 {strides = array<i32>} : memref<4x32xf32, #tpu.memory_space<vmem>>, vector<4x32xf32>,
    } else {
    }
    %c0 = arith.constant 0 : index
    %c0_1 = arith.constant 0 : index
    %3 = vector.load %arg25[%c0, %c0_1] : memref<4x32xf32, #tpu.memory_space<vmem>>, vector<4x32xf32>
    %c0_2 = arith.constant 0 : index
    %c0_3 = arith.constant 0 : index
    %4 = vector.load %arg24[%c0_2, %c0_3] : memref<8x32xbf16, #tpu.memory_space<vmem>>, vector<8x32xbf16>
    %c0_4 = arith.constant 0 : index
    %c0_5 = arith.constant 0 : index
    %c0_6 = arith.constant 0 : index
    %5 = vector.load %arg7[%c0_4, %c0_5, %c0_6] : memref<1x1x32xf32, #tpu.memory_space<vmem>>, vector<1x1x32xf32>
    %6 = vector.shape_cast %5 : vector<1x1x32xf32> to vector<1x32xf32>
    %c0_7 = arith.constant 0 : index
    %c0_8 = arith.constant 0 : index
    %c0_9 = arith.constant 0 : index
    %7 = vector.load %arg8[%c0_7, %c0_8, %c0_9] : memref<1x1x32xf32, #tpu.memory_space<vmem>>, vector<1x1x32xf32>
    %8 = vector.shape_cast %7 : vector<1x1x32xf32> to vector<1x32xf32>
    %cst = arith.constant dense<0.000000e+00> : vector<4xf32>
    %9 = vector.multi_reduction <add>, %3, %cst [1] : vector<4x32xf32> to vector<4xf32>
    %10 = vector.shape_cast %9 : vector<4xf32> to vector<4x1xf32>
    %cst_10 = arith.constant 3.200000e+01 : f32
    %11 = vector.broadcast %cst_10 : f32 to vector<4x1xf32>
    %12 = arith.divf %10, %11 : vector<4x1xf32>
    %13 = vector.broadcast %12 : vector<4x1xf32> to vector<4x32xf32>
    %14 = arith.subf %3, %13 : vector<4x32xf32>
    %15 = arith.mulf %14, %14 : vector<4x32xf32>
    %cst_11 = arith.constant dense<0.000000e+00> : vector<4xf32>
    %16 = vector.multi_reduction <add>, %15, %cst_11 [1] : vector<4x32xf32> to vector<4xf32>
    %17 = vector.shape_cast %16 : vector<4xf32> to vector<4x1xf32>
    %cst_12 = arith.constant 3.200000e+01 : f32
    %18 = vector.broadcast %cst_12 : f32 to vector<4x1xf32>
    %19 = arith.divf %17, %18 : vector<4x1xf32>
    %cst_13 = arith.constant 9.99999974E-6 : f32
    %20 = vector.broadcast %cst_13 : f32 to vector<4x1xf32>
    %21 = arith.addf %19, %20 : vector<4x1xf32>
    %22 = math.rsqrt %21 : vector<4x1xf32>
    %23 = vector.broadcast %22 : vector<4x1xf32> to vector<4x32xf32>
    %24 = arith.mulf %14, %23 : vector<4x32xf32>
    %25 = vector.broadcast %6 : vector<1x32xf32> to vector<4x32xf32>
    %26 = arith.mulf %24, %25 : vector<4x32xf32>
    %27 = vector.broadcast %8 : vector<1x32xf32> to vector<4x32xf32>
    %28 = arith.addf %26, %27 : vector<4x32xf32>
    %29 = arith.truncf %28 : vector<4x32xf32> to vector<4x32xbf16>
    %c0_14 = arith.constant 0 : index
    %c0_15 = arith.constant 0 : index
    %c0_16 = arith.constant 0 : index
    %30 = vector.load %arg9[%c0_14, %c0_15, %c0_16] : memref<1x32x32xbf16, #tpu.memory_space<vmem>>, vector<1x32x32xbf16>
    %31 = vector.shape_cast %30 : vector<1x32x32xbf16> to vector<32x32xbf16>
    %cst_17 = arith.constant dense<0.000000e+00> : vector<4x32xf32>
    %32 = tpu.matmul %29, %31, %cst_17 {dimension_numbers = #tpu.dot_dimension_numbers<[1], [0], [0], [1], [0, 0, 1, 1], [], []>} : vector<4x32xbf16>, vector<32x32xbf16>, vector<4x32xf32> -> vector<4x32xf32>
    %cst_18 = arith.constant 0.353553385 : f32
    %33 = vector.broadcast %cst_18 : f32 to vector<4x32xf32>
    %34 = arith.mulf %32, %33 : vector<4x32xf32>
    %c0_19 = arith.constant 0 : index
    %c0_20 = arith.constant 0 : index
    %c0_21 = arith.constant 0 : index
    %35 = vector.load %arg10[%c0_19, %c0_20, %c0_21] : memref<1x32x64xbf16, #tpu.memory_space<vmem>>, vector<1x32x64xbf16>
    %36 = vector.shape_cast %35 : vector<1x32x64xbf16> to vector<32x64xbf16>
    %cst_22 = arith.constant dense<0.000000e+00> : vector<8x64xf32>
    %37 = tpu.matmul %4, %36, %cst_22 {dimension_numbers = #tpu.dot_dimension_numbers<[1], [0], [0], [1], [0, 0, 1, 1], [], []>} : vector<8x32xbf16>, vector<32x64xbf16>, vector<8x64xf32> -> vector<8x64xf32>
    %38 = arith.truncf %34 : vector<4x32xf32> to vector<4x32xbf16>
    %39 = arith.truncf %37 : vector<8x64xf32> to vector<8x64xbf16>
    %c0_23 = arith.constant 0 : index
    %c0_24 = arith.constant 0 : index
    %c0_25 = arith.constant 0 : index
    %40 = vector.load %arg11[%c0_23, %c0_24, %c0_25] : memref<1x32x32xbf16, #tpu.memory_space<vmem>>, vector<1x32x32xbf16>
    %41 = vector.shape_cast %40 : vector<1x32x32xbf16> to vector<32x32xbf16>
    %cst_26 = arith.constant 0.000000e+00 : f32
    %42 = vector.broadcast %cst_26 : f32 to vector<4x32xf32>
    %43 = vector.extract_strided_slice %38 {offsets = [0, 0], sizes = [4, 8], strides = [1, 1]} : vector<4x32xbf16> to vector<4x8xbf16>
    %44 = vector.shape_cast %43 : vector<4x8xbf16> to vector<1x4x8xbf16>
    %45 = vector.extract_strided_slice %39 {offsets = [0, 0], sizes = [8, 8], strides = [1, 1]} : vector<8x64xbf16> to vector<8x8xbf16>
    %46 = vector.shape_cast %45 : vector<8x8xbf16> to vector<1x8x8xbf16>
    %47 = vector.extract_strided_slice %39 {offsets = [0, 32], sizes = [8, 8], strides = [1, 1]} : vector<8x64xbf16> to vector<8x8xbf16>
    %48 = vector.shape_cast %47 : vector<8x8xbf16> to vector<1x8x8xbf16>
    %cst_27 = arith.constant dense<0.000000e+00> : vector<1x4x8xf32>
    %49 = tpu.matmul %44, %46, %cst_27 {dimension_numbers = #tpu.dot_dimension_numbers<[2], [2], [1], [1], [0, 0, 0, 1, 1, 1], [0], [0]>} : vector<1x4x8xbf16>, vector<1x8x8xbf16>, vector<1x4x8xf32> -> vector<1x4x8xf32>
    %cst_28 = arith.constant dense<0xFF800000> : vector<1x4xf32>
    %50 = vector.multi_reduction <maximumf>, %49, %cst_28 [2] : vector<1x4x8xf32> to vector<1x4xf32>
    %51 = vector.shape_cast %50 : vector<1x4xf32> to vector<1x4x1xf32>
    %52 = vector.broadcast %51 : vector<1x4x1xf32> to vector<1x4x8xf32>
    %53 = arith.subf %49, %52 : vector<1x4x8xf32>
    %54 = math.exp %53 : vector<1x4x8xf32>
    %cst_29 = arith.constant dense<0.000000e+00> : vector<1x4xf32>
    %55 = vector.multi_reduction <add>, %54, %cst_29 [2] : vector<1x4x8xf32> to vector<1x4xf32>
    %56 = vector.shape_cast %55 : vector<1x4xf32> to vector<1x4x1xf32>
    %57 = tpu.reciprocal %56 {approx = true} : vector<1x4x1xf32> -> vector<1x4x1xf32>
    %58 = vector.broadcast %57 : vector<1x4x1xf32> to vector<1x4x8xf32>
    %59 = arith.mulf %54, %58 : vector<1x4x8xf32>
    %60 = arith.truncf %59 : vector<1x4x8xf32> to vector<1x4x8xbf16>
    %cst_30 = arith.constant dense<0.000000e+00> : vector<1x4x8xf32>
    %61 = tpu.matmul %60, %48, %cst_30 {dimension_numbers = #tpu.dot_dimension_numbers<[2], [1], [1], [2], [0, 0, 0, 1, 1, 2], [0], [0]>} : vector<1x4x8xbf16>, vector<1x8x8xbf16>, vector<1x4x8xf32> -> vector<1x4x8xf32>
    %62 = vector.shape_cast %61 : vector<1x4x8xf32> to vector<4x8xf32>
    %63 = arith.truncf %62 : vector<4x8xf32> to vector<4x8xbf16>
    %64 = vector.extract_strided_slice %41 {offsets = [0, 0], sizes = [8, 32], strides = [1, 1]} : vector<32x32xbf16> to vector<8x32xbf16>
    %cst_31 = arith.constant dense<0.000000e+00> : vector<4x32xf32>
    %65 = tpu.matmul %63, %64, %cst_31 {dimension_numbers = #tpu.dot_dimension_numbers<[1], [0], [0], [1], [0, 0, 1, 1], [], []>} : vector<4x8xbf16>, vector<8x32xbf16>, vector<4x32xf32> -> vector<4x32xf32>
    %66 = arith.addf %42, %65 : vector<4x32xf32>
    %67 = vector.extract_strided_slice %38 {offsets = [0, 8], sizes = [4, 8], strides = [1, 1]} : vector<4x32xbf16> to vector<4x8xbf16>
    %68 = vector.shape_cast %67 : vector<4x8xbf16> to vector<1x4x8xbf16>
    %69 = vector.extract_strided_slice %39 {offsets = [0, 8], sizes = [8, 8], strides = [1, 1]} : vector<8x64xbf16> to vector<8x8xbf16>
    %70 = vector.shape_cast %69 : vector<8x8xbf16> to vector<1x8x8xbf16>
    %71 = vector.extract_strided_slice %39 {offsets = [0, 40], sizes = [8, 8], strides = [1, 1]} : vector<8x64xbf16> to vector<8x8xbf16>
    %72 = vector.shape_cast %71 : vector<8x8xbf16> to vector<1x8x8xbf16>
    %cst_32 = arith.constant dense<0.000000e+00> : vector<1x4x8xf32>
    %73 = tpu.matmul %68, %70, %cst_32 {dimension_numbers = #tpu.dot_dimension_numbers<[2], [2], [1], [1], [0, 0, 0, 1, 1, 1], [0], [0]>} : vector<1x4x8xbf16>, vector<1x8x8xbf16>, vector<1x4x8xf32> -> vector<1x4x8xf32>
    %cst_33 = arith.constant dense<0xFF800000> : vector<1x4xf32>
    %74 = vector.multi_reduction <maximumf>, %73, %cst_33 [2] : vector<1x4x8xf32> to vector<1x4xf32>
    %75 = vector.shape_cast %74 : vector<1x4xf32> to vector<1x4x1xf32>
    %76 = vector.broadcast %75 : vector<1x4x1xf32> to vector<1x4x8xf32>
    %77 = arith.subf %73, %76 : vector<1x4x8xf32>
    %78 = math.exp %77 : vector<1x4x8xf32>
    %cst_34 = arith.constant dense<0.000000e+00> : vector<1x4xf32>
    %79 = vector.multi_reduction <add>, %78, %cst_34 [2] : vector<1x4x8xf32> to vector<1x4xf32>
    %80 = vector.shape_cast %79 : vector<1x4xf32> to vector<1x4x1xf32>
    %81 = tpu.reciprocal %80 {approx = true} : vector<1x4x1xf32> -> vector<1x4x1xf32>
    %82 = vector.broadcast %81 : vector<1x4x1xf32> to vector<1x4x8xf32>
    %83 = arith.mulf %78, %82 : vector<1x4x8xf32>
    %84 = arith.truncf %83 : vector<1x4x8xf32> to vector<1x4x8xbf16>
    %cst_35 = arith.constant dense<0.000000e+00> : vector<1x4x8xf32>
    %85 = tpu.matmul %84, %72, %cst_35 {dimension_numbers = #tpu.dot_dimension_numbers<[2], [1], [1], [2], [0, 0, 0, 1, 1, 2], [0], [0]>} : vector<1x4x8xbf16>, vector<1x8x8xbf16>, vector<1x4x8xf32> -> vector<1x4x8xf32>
    %86 = vector.shape_cast %85 : vector<1x4x8xf32> to vector<4x8xf32>
    %87 = arith.truncf %86 : vector<4x8xf32> to vector<4x8xbf16>
    %88 = vector.extract_strided_slice %41 {offsets = [8, 0], sizes = [8, 32], strides = [1, 1]} : vector<32x32xbf16> to vector<8x32xbf16>
    %cst_36 = arith.constant dense<0.000000e+00> : vector<4x32xf32>
    %89 = tpu.matmul %87, %88, %cst_36 {dimension_numbers = #tpu.dot_dimension_numbers<[1], [0], [0], [1], [0, 0, 1, 1], [], []>} : vector<4x8xbf16>, vector<8x32xbf16>, vector<4x32xf32> -> vector<4x32xf32>
    %90 = arith.addf %66, %89 : vector<4x32xf32>
    %91 = vector.extract_strided_slice %38 {offsets = [0, 16], sizes = [4, 8], strides = [1, 1]} : vector<4x32xbf16> to vector<4x8xbf16>
    %92 = vector.shape_cast %91 : vector<4x8xbf16> to vector<1x4x8xbf16>
    %93 = vector.extract_strided_slice %39 {offsets = [0, 16], sizes = [8, 8], strides = [1, 1]} : vector<8x64xbf16> to vector<8x8xbf16>
    %94 = vector.shape_cast %93 : vector<8x8xbf16> to vector<1x8x8xbf16>
    %95 = vector.extract_strided_slice %39 {offsets = [0, 48], sizes = [8, 8], strides = [1, 1]} : vector<8x64xbf16> to vector<8x8xbf16>
    %96 = vector.shape_cast %95 : vector<8x8xbf16> to vector<1x8x8xbf16>
    %cst_37 = arith.constant dense<0.000000e+00> : vector<1x4x8xf32>
    %97 = tpu.matmul %92, %94, %cst_37 {dimension_numbers = #tpu.dot_dimension_numbers<[2], [2], [1], [1], [0, 0, 0, 1, 1, 1], [0], [0]>} : vector<1x4x8xbf16>, vector<1x8x8xbf16>, vector<1x4x8xf32> -> vector<1x4x8xf32>
    %cst_38 = arith.constant dense<0xFF800000> : vector<1x4xf32>
    %98 = vector.multi_reduction <maximumf>, %97, %cst_38 [2] : vector<1x4x8xf32> to vector<1x4xf32>
    %99 = vector.shape_cast %98 : vector<1x4xf32> to vector<1x4x1xf32>
    %100 = vector.broadcast %99 : vector<1x4x1xf32> to vector<1x4x8xf32>
    %101 = arith.subf %97, %100 : vector<1x4x8xf32>
    %102 = math.exp %101 : vector<1x4x8xf32>
    %cst_39 = arith.constant dense<0.000000e+00> : vector<1x4xf32>
    %103 = vector.multi_reduction <add>, %102, %cst_39 [2] : vector<1x4x8xf32> to vector<1x4xf32>
    %104 = vector.shape_cast %103 : vector<1x4xf32> to vector<1x4x1xf32>
    %105 = tpu.reciprocal %104 {approx = true} : vector<1x4x1xf32> -> vector<1x4x1xf32>
    %106 = vector.broadcast %105 : vector<1x4x1xf32> to vector<1x4x8xf32>
    %107 = arith.mulf %102, %106 : vector<1x4x8xf32>
    %108 = arith.truncf %107 : vector<1x4x8xf32> to vector<1x4x8xbf16>
    %cst_40 = arith.constant dense<0.000000e+00> : vector<1x4x8xf32>
    %109 = tpu.matmul %108, %96, %cst_40 {dimension_numbers = #tpu.dot_dimension_numbers<[2], [1], [1], [2], [0, 0, 0, 1, 1, 2], [0], [0]>} : vector<1x4x8xbf16>, vector<1x8x8xbf16>, vector<1x4x8xf32> -> vector<1x4x8xf32>
    %110 = vector.shape_cast %109 : vector<1x4x8xf32> to vector<4x8xf32>
    %111 = arith.truncf %110 : vector<4x8xf32> to vector<4x8xbf16>
    %112 = vector.extract_strided_slice %41 {offsets = [16, 0], sizes = [8, 32], strides = [1, 1]} : vector<32x32xbf16> to vector<8x32xbf16>
    %cst_41 = arith.constant dense<0.000000e+00> : vector<4x32xf32>
    %113 = tpu.matmul %111, %112, %cst_41 {dimension_numbers = #tpu.dot_dimension_numbers<[1], [0], [0], [1], [0, 0, 1, 1], [], []>} : vector<4x8xbf16>, vector<8x32xbf16>, vector<4x32xf32> -> vector<4x32xf32>
    %114 = arith.addf %90, %113 : vector<4x32xf32>
    %115 = vector.extract_strided_slice %38 {offsets = [0, 24], sizes = [4, 8], strides = [1, 1]} : vector<4x32xbf16> to vector<4x8xbf16>
    %116 = vector.shape_cast %115 : vector<4x8xbf16> to vector<1x4x8xbf16>
    %117 = vector.extract_strided_slice %39 {offsets = [0, 24], sizes = [8, 8], strides = [1, 1]} : vector<8x64xbf16> to vector<8x8xbf16>
    %118 = vector.shape_cast %117 : vector<8x8xbf16> to vector<1x8x8xbf16>
    %119 = vector.extract_strided_slice %39 {offsets = [0, 56], sizes = [8, 8], strides = [1, 1]} : vector<8x64xbf16> to vector<8x8xbf16>
    %120 = vector.shape_cast %119 : vector<8x8xbf16> to vector<1x8x8xbf16>
    %cst_42 = arith.constant dense<0.000000e+00> : vector<1x4x8xf32>
    %121 = tpu.matmul %116, %118, %cst_42 {dimension_numbers = #tpu.dot_dimension_numbers<[2], [2], [1], [1], [0, 0, 0, 1, 1, 1], [0], [0]>} : vector<1x4x8xbf16>, vector<1x8x8xbf16>, vector<1x4x8xf32> -> vector<1x4x8xf32>
    %cst_43 = arith.constant dense<0xFF800000> : vector<1x4xf32>
    %122 = vector.multi_reduction <maximumf>, %121, %cst_43 [2] : vector<1x4x8xf32> to vector<1x4xf32>
    %123 = vector.shape_cast %122 : vector<1x4xf32> to vector<1x4x1xf32>
    %124 = vector.broadcast %123 : vector<1x4x1xf32> to vector<1x4x8xf32>
    %125 = arith.subf %121, %124 : vector<1x4x8xf32>
    %126 = math.exp %125 : vector<1x4x8xf32>
    %cst_44 = arith.constant dense<0.000000e+00> : vector<1x4xf32>
    %127 = vector.multi_reduction <add>, %126, %cst_44 [2] : vector<1x4x8xf32> to vector<1x4xf32>
    %128 = vector.shape_cast %127 : vector<1x4xf32> to vector<1x4x1xf32>
    %129 = tpu.reciprocal %128 {approx = true} : vector<1x4x1xf32> -> vector<1x4x1xf32>
    %130 = vector.broadcast %129 : vector<1x4x1xf32> to vector<1x4x8xf32>
    %131 = arith.mulf %126, %130 : vector<1x4x8xf32>
    %132 = arith.truncf %131 : vector<1x4x8xf32> to vector<1x4x8xbf16>
    %cst_45 = arith.constant dense<0.000000e+00> : vector<1x4x8xf32>
    %133 = tpu.matmul %132, %120, %cst_45 {dimension_numbers = #tpu.dot_dimension_numbers<[2], [1], [1], [2], [0, 0, 0, 1, 1, 2], [0], [0]>} : vector<1x4x8xbf16>, vector<1x8x8xbf16>, vector<1x4x8xf32> -> vector<1x4x8xf32>
    %134 = vector.shape_cast %133 : vector<1x4x8xf32> to vector<4x8xf32>
    %135 = arith.truncf %134 : vector<4x8xf32> to vector<4x8xbf16>
    %136 = vector.extract_strided_slice %41 {offsets = [24, 0], sizes = [8, 32], strides = [1, 1]} : vector<32x32xbf16> to vector<8x32xbf16>
    %cst_46 = arith.constant dense<0.000000e+00> : vector<4x32xf32>
    %137 = tpu.matmul %135, %136, %cst_46 {dimension_numbers = #tpu.dot_dimension_numbers<[1], [0], [0], [1], [0, 0, 1, 1], [], []>} : vector<4x8xbf16>, vector<8x32xbf16>, vector<4x32xf32> -> vector<4x32xf32>
    %138 = arith.addf %114, %137 : vector<4x32xf32>
    %139 = arith.addf %3, %138 : vector<4x32xf32>
    %c0_47 = arith.constant 0 : index
    %c0_48 = arith.constant 0 : index
    %c0_49 = arith.constant 0 : index
    %140 = vector.load %arg12[%c0_47, %c0_48, %c0_49] : memref<1x1x32xf32, #tpu.memory_space<vmem>>, vector<1x1x32xf32>
    %141 = vector.shape_cast %140 : vector<1x1x32xf32> to vector<1x32xf32>
    %142 = vector.broadcast %141 : vector<1x32xf32> to vector<4x32xf32>
    %143 = arith.addf %139, %142 : vector<4x32xf32>
    %c0_50 = arith.constant 0 : index
    %c0_51 = arith.constant 0 : index
    %c0_52 = arith.constant 0 : index
    %144 = vector.load %arg13[%c0_50, %c0_51, %c0_52] : memref<1x1x32xf32, #tpu.memory_space<vmem>>, vector<1x1x32xf32>
    %145 = vector.shape_cast %144 : vector<1x1x32xf32> to vector<1x32xf32>
    %c0_53 = arith.constant 0 : index
    %c0_54 = arith.constant 0 : index
    %c0_55 = arith.constant 0 : index
    %146 = vector.load %arg14[%c0_53, %c0_54, %c0_55] : memref<1x1x32xf32, #tpu.memory_space<vmem>>, vector<1x1x32xf32>
    %147 = vector.shape_cast %146 : vector<1x1x32xf32> to vector<1x32xf32>
    %cst_56 = arith.constant dense<0.000000e+00> : vector<4xf32>
    %148 = vector.multi_reduction <add>, %143, %cst_56 [1] : vector<4x32xf32> to vector<4xf32>
    %149 = vector.shape_cast %148 : vector<4xf32> to vector<4x1xf32>
    %cst_57 = arith.constant 3.200000e+01 : f32
    %150 = vector.broadcast %cst_57 : f32 to vector<4x1xf32>
    %151 = arith.divf %149, %150 : vector<4x1xf32>
    %152 = vector.broadcast %151 : vector<4x1xf32> to vector<4x32xf32>
    %153 = arith.subf %143, %152 : vector<4x32xf32>
    %154 = arith.mulf %153, %153 : vector<4x32xf32>
    %cst_58 = arith.constant dense<0.000000e+00> : vector<4xf32>
    %155 = vector.multi_reduction <add>, %154, %cst_58 [1] : vector<4x32xf32> to vector<4xf32>
    %156 = vector.shape_cast %155 : vector<4xf32> to vector<4x1xf32>
    %cst_59 = arith.constant 3.200000e+01 : f32
    %157 = vector.broadcast %cst_59 : f32 to vector<4x1xf32>
    %158 = arith.divf %156, %157 : vector<4x1xf32>
    %cst_60 = arith.constant 9.99999974E-6 : f32
    %159 = vector.broadcast %cst_60 : f32 to vector<4x1xf32>
    %160 = arith.addf %158, %159 : vector<4x1xf32>
    %161 = math.rsqrt %160 : vector<4x1xf32>
    %162 = vector.broadcast %161 : vector<4x1xf32> to vector<4x32xf32>
    %163 = arith.mulf %153, %162 : vector<4x32xf32>
    %164 = vector.broadcast %145 : vector<1x32xf32> to vector<4x32xf32>
    %165 = arith.mulf %163, %164 : vector<4x32xf32>
    %166 = vector.broadcast %147 : vector<1x32xf32> to vector<4x32xf32>
    %167 = arith.addf %165, %166 : vector<4x32xf32>
    %168 = arith.truncf %167 : vector<4x32xf32> to vector<4x32xbf16>
    %c0_61 = arith.constant 0 : index
    %c0_62 = arith.constant 0 : index
    %c0_63 = arith.constant 0 : index
    %169 = vector.load %arg15[%c0_61, %c0_62, %c0_63] : memref<1x32x128xbf16, #tpu.memory_space<vmem>>, vector<1x32x128xbf16>
    %170 = vector.shape_cast %169 : vector<1x32x128xbf16> to vector<32x128xbf16>
    %cst_64 = arith.constant dense<0.000000e+00> : vector<4x128xf32>
    %171 = tpu.matmul %168, %170, %cst_64 {dimension_numbers = #tpu.dot_dimension_numbers<[1], [0], [0], [1], [0, 0, 1, 1], [], []>} : vector<4x32xbf16>, vector<32x128xbf16>, vector<4x128xf32> -> vector<4x128xf32>
    %c0_65 = arith.constant 0 : index
    %c0_66 = arith.constant 0 : index
    %c0_67 = arith.constant 0 : index
    %172 = vector.load %arg16[%c0_65, %c0_66, %c0_67] : memref<1x1x128xf32, #tpu.memory_space<vmem>>, vector<1x1x128xf32>
    %173 = vector.shape_cast %172 : vector<1x1x128xf32> to vector<1x128xf32>
    %174 = vector.broadcast %173 : vector<1x128xf32> to vector<4x128xf32>
    %175 = arith.addf %171, %174 : vector<4x128xf32>
    %cst_68 = arith.constant 5.000000e-01 : f32
    %176 = vector.broadcast %cst_68 : f32 to vector<4x128xf32>
    %177 = arith.mulf %176, %175 : vector<4x128xf32>
    %cst_69 = arith.constant 0.707106769 : f32
    %178 = vector.broadcast %cst_69 : f32 to vector<4x128xf32>
    %179 = arith.mulf %175, %178 : vector<4x128xf32>
    %180 = math.absf %179 : vector<4x128xf32>
    %cst_70 = arith.constant 0.327591091 : f32
    %181 = vector.broadcast %cst_70 : f32 to vector<4x128xf32>
    %182 = arith.mulf %181, %180 : vector<4x128xf32>
    %cst_71 = arith.constant 1.000000e+00 : f32
    %183 = vector.broadcast %cst_71 : f32 to vector<4x128xf32>
    %184 = arith.addf %183, %182 : vector<4x128xf32>
    %cst_72 = arith.constant 1.000000e+00 : f32
    %185 = vector.broadcast %cst_72 : f32 to vector<4x128xf32>
    %186 = arith.divf %185, %184 : vector<4x128xf32>
    %cst_73 = arith.constant 1.06140542 : f32
    %187 = vector.broadcast %cst_73 : f32 to vector<4x128xf32>
    %188 = arith.mulf %187, %186 : vector<4x128xf32>
    %cst_74 = arith.constant -1.45315206 : f32
    %189 = vector.broadcast %cst_74 : f32 to vector<4x128xf32>
    %190 = arith.addf %188, %189 : vector<4x128xf32>
    %191 = arith.mulf %190, %186 : vector<4x128xf32>
    %cst_75 = arith.constant 1.42141378 : f32
    %192 = vector.broadcast %cst_75 : f32 to vector<4x128xf32>
    %193 = arith.addf %191, %192 : vector<4x128xf32>
    %194 = arith.mulf %193, %186 : vector<4x128xf32>
    %cst_76 = arith.constant -0.284496725 : f32
    %195 = vector.broadcast %cst_76 : f32 to vector<4x128xf32>
    %196 = arith.addf %194, %195 : vector<4x128xf32>
    %197 = arith.mulf %196, %186 : vector<4x128xf32>
    %cst_77 = arith.constant 0.254829586 : f32
    %198 = vector.broadcast %cst_77 : f32 to vector<4x128xf32>
    %199 = arith.addf %197, %198 : vector<4x128xf32>
    %200 = arith.mulf %199, %186 : vector<4x128xf32>
    %cst_78 = arith.constant 0.000000e+00 : f32
    %201 = vector.broadcast %cst_78 : f32 to vector<4x128xf32>
    %202 = arith.subf %201, %180 : vector<4x128xf32>
    %203 = arith.mulf %202, %180 : vector<4x128xf32>
    %204 = math.exp %203 : vector<4x128xf32>
    %205 = arith.mulf %200, %204 : vector<4x128xf32>
    %cst_79 = arith.constant 1.000000e+00 : f32
    %206 = vector.broadcast %cst_79 : f32 to vector<4x128xf32>
    %207 = arith.subf %206, %205 : vector<4x128xf32>
    %cst_80 = arith.constant 0.000000e+00 : f32
    %208 = vector.broadcast %cst_80 : f32 to vector<4x128xf32>
    %209 = arith.cmpf oge, %179, %208 : vector<4x128xf32>
    %cst_81 = arith.constant 0.000000e+00 : f32
    %210 = vector.broadcast %cst_81 : f32 to vector<4x128xf32>
    %211 = arith.subf %210, %207 : vector<4x128xf32>
    %212 = arith.select %209, %207, %211 : vector<4x128xi1>, vector<4x128xf32>
    %cst_82 = arith.constant 1.000000e+00 : f32
    %213 = vector.broadcast %cst_82 : f32 to vector<4x128xf32>
    %214 = arith.addf %213, %212 : vector<4x128xf32>
    %215 = arith.mulf %177, %214 : vector<4x128xf32>
    %216 = arith.truncf %215 : vector<4x128xf32> to vector<4x128xbf16>
    %c0_83 = arith.constant 0 : index
    %c0_84 = arith.constant 0 : index
    %c0_85 = arith.constant 0 : index
    %217 = vector.load %arg17[%c0_83, %c0_84, %c0_85] : memref<1x128x32xbf16, #tpu.memory_space<vmem>>, vector<1x128x32xbf16>
    %218 = vector.shape_cast %217 : vector<1x128x32xbf16> to vector<128x32xbf16>
    %cst_86 = arith.constant dense<0.000000e+00> : vector<4x32xf32>
    %219 = tpu.matmul %216, %218, %cst_86 {dimension_numbers = #tpu.dot_dimension_numbers<[1], [0], [0], [1], [0, 0, 1, 1], [], []>} : vector<4x128xbf16>, vector<128x32xbf16>, vector<4x32xf32> -> vector<4x32xf32>
    %220 = arith.addf %143, %219 : vector<4x32xf32>
    %c0_87 = arith.constant 0 : index
    %c0_88 = arith.constant 0 : index
    %c0_89 = arith.constant 0 : index
    %221 = vector.load %arg18[%c0_87, %c0_88, %c0_89] : memref<1x1x32xf32, #tpu.memory_space<vmem>>, vector<1x1x32xf32>
    %222 = vector.shape_cast %221 : vector<1x1x32xf32> to vector<1x32xf32>
    %223 = vector.broadcast %222 : vector<1x32xf32> to vector<4x32xf32>
    %224 = arith.addf %220, %223 : vector<4x32xf32>
    %c0_90 = arith.constant 0 : index
    %c0_91 = arith.constant 0 : index
    %225 = vector.load %arg25[%c0_90, %c0_91] : memref<4x32xf32, #tpu.memory_space<vmem>>, vector<4x32xf32>
    tpu.vector_store %arg25[%c0_90, %c0_91], %224 {strides = array<i32>} : memref<4x32xf32, #tpu.memory_space<vmem>>, vector<4x32xf32>,
    %c1_i32 = arith.constant 1 : i32
    %226 = arith.cmpi eq, %arg1, %c1_i32 : i32
    %227 = arith.extui %226 : i1 to i32
    %c0_i32_92 = arith.constant 0 : i32
    %228 = arith.cmpi ne, %227, %c0_i32_92 : i32
    scf.if %228 {
      %c0_93 = arith.constant 0 : index
      %c0_94 = arith.constant 0 : index
      %229 = vector.load %arg19[%c0_93, %c0_94] : memref<1x32xf32, #tpu.memory_space<vmem>>, vector<1x32xf32>
      %c0_95 = arith.constant 0 : index
      %c0_96 = arith.constant 0 : index
      %230 = vector.load %arg20[%c0_95, %c0_96] : memref<1x32xf32, #tpu.memory_space<vmem>>, vector<1x32xf32>
      %cst_97 = arith.constant dense<0.000000e+00> : vector<4xf32>
      %231 = vector.multi_reduction <add>, %224, %cst_97 [1] : vector<4x32xf32> to vector<4xf32>
      %232 = vector.shape_cast %231 : vector<4xf32> to vector<4x1xf32>
      %cst_98 = arith.constant 3.200000e+01 : f32
      %233 = vector.broadcast %cst_98 : f32 to vector<4x1xf32>
      %234 = arith.divf %232, %233 : vector<4x1xf32>
      %235 = vector.broadcast %234 : vector<4x1xf32> to vector<4x32xf32>
      %236 = arith.subf %224, %235 : vector<4x32xf32>
      %237 = arith.mulf %236, %236 : vector<4x32xf32>
      %cst_99 = arith.constant dense<0.000000e+00> : vector<4xf32>
      %238 = vector.multi_reduction <add>, %237, %cst_99 [1] : vector<4x32xf32> to vector<4xf32>
      %239 = vector.shape_cast %238 : vector<4xf32> to vector<4x1xf32>
      %cst_100 = arith.constant 3.200000e+01 : f32
      %240 = vector.broadcast %cst_100 : f32 to vector<4x1xf32>
      %241 = arith.divf %239, %240 : vector<4x1xf32>
      %cst_101 = arith.constant 9.99999974E-6 : f32
      %242 = vector.broadcast %cst_101 : f32 to vector<4x1xf32>
      %243 = arith.addf %241, %242 : vector<4x1xf32>
      %244 = math.rsqrt %243 : vector<4x1xf32>
      %245 = vector.broadcast %244 : vector<4x1xf32> to vector<4x32xf32>
      %246 = arith.mulf %236, %245 : vector<4x32xf32>
      %247 = vector.broadcast %229 : vector<1x32xf32> to vector<4x32xf32>
      %248 = arith.mulf %246, %247 : vector<4x32xf32>
      %249 = vector.broadcast %230 : vector<1x32xf32> to vector<4x32xf32>
      %250 = arith.addf %248, %249 : vector<4x32xf32>
      %251 = arith.truncf %250 : vector<4x32xf32> to vector<4x32xbf16>
      %c0_102 = arith.constant 0 : index
      %c0_103 = arith.constant 0 : index
      %252 = vector.load %arg21[%c0_102, %c0_103] : memref<32x128xbf16, #tpu.memory_space<vmem>>, vector<32x128xbf16>
      %cst_104 = arith.constant dense<0.000000e+00> : vector<4x128xf32>
      %253 = tpu.matmul %251, %252, %cst_104 {dimension_numbers = #tpu.dot_dimension_numbers<[1], [0], [0], [1], [0, 0, 1, 1], [], []>} : vector<4x32xbf16>, vector<32x128xbf16>, vector<4x128xf32> -> vector<4x128xf32>
      %c0_105 = arith.constant 0 : index
      %c0_106 = arith.constant 0 : index
      %254 = vector.load %arg22[%c0_105, %c0_106] : memref<1x128xf32, #tpu.memory_space<vmem>>, vector<1x128xf32>
      %255 = vector.broadcast %254 : vector<1x128xf32> to vector<4x128xf32>
      %256 = arith.addf %253, %255 : vector<4x128xf32>
      %257 = vector.shape_cast %256 : vector<4x128xf32> to vector<1x4x128xf32>
      %c0_107 = arith.constant 0 : index
      %c0_108 = arith.constant 0 : index
      %c0_109 = arith.constant 0 : index
      %258 = vector.load %arg23[%c0_107, %c0_108, %c0_109] : memref<1x4x128xf32, #tpu.memory_space<vmem>>, vector<1x4x128xf32>
      tpu.vector_store %arg23[%c0_107, %c0_108, %c0_109], %257 {strides = array<i32>} : memref<1x4x128xf32, #tpu.memory_space<vmem>>, vector<1x4x128xf32>,
    } else {
    }
    return
  }
  func.func @transform_0(%arg0: i32, %arg1: i32) -> (i32, i32, i32) {
    %c0_i32 = arith.constant 0 : i32
    %c0_i32_0 = arith.constant 0 : i32
    %c0_i32_1 = arith.constant 0 : i32
    return %arg0, %c0_i32, %c0_i32_0 : i32, i32, i32
  }
  func.func @transform_1(%arg0: i32, %arg1: i32) -> (i32, i32, i32) {
    %c0_i32 = arith.constant 0 : i32
    %c0_i32_0 = arith.constant 0 : i32
    %c0_i32_1 = arith.constant 0 : i32
    return %arg0, %c0_i32, %c0_i32_0 : i32, i32, i32
  }
  func.func @transform_2(%arg0: i32, %arg1: i32) -> (i32, i32) {
    %c0_i32 = arith.constant 0 : i32
    %c0_i32_0 = arith.constant 0 : i32
    %c0_i32_1 = arith.constant 0 : i32
    return %c0_i32, %c0_i32_0 : i32, i32
  }
  func.func @transform_3(%arg0: i32, %arg1: i32) -> (i32, i32) {
    %c0_i32 = arith.constant 0 : i32
    %c0_i32_0 = arith.constant 0 : i32
    %c0_i32_1 = arith.constant 0 : i32
    return %c0_i32, %c0_i32_0 : i32, i32
  }
  func.func @transform_4(%arg0: i32, %arg1: i32) -> (i32, i32) {
    %c0_i32 = arith.constant 0 : i32
    %c0_i32_0 = arith.constant 0 : i32
    %c0_i32_1 = arith.constant 0 : i32
    return %c0_i32, %c0_i32_0 : i32, i32
  }
  func.func @transform_5(%arg0: i32, %arg1: i32) -> (i32, i32, i32) {
    %c0_i32 = arith.constant 0 : i32
    %c0_i32_0 = arith.constant 0 : i32
    %c0_i32_1 = arith.constant 0 : i32
    return %arg1, %c0_i32, %c0_i32_0 : i32, i32, i32
  }
  func.func @transform_6(%arg0: i32, %arg1: i32) -> (i32, i32, i32) {
    %c0_i32 = arith.constant 0 : i32
    %c0_i32_0 = arith.constant 0 : i32
    %c0_i32_1 = arith.constant 0 : i32
    return %arg1, %c0_i32, %c0_i32_0 : i32, i32, i32
  }
  func.func @transform_7(%arg0: i32, %arg1: i32) -> (i32, i32, i32) {
    %c0_i32 = arith.constant 0 : i32
    %c0_i32_0 = arith.constant 0 : i32
    %c0_i32_1 = arith.constant 0 : i32
    return %arg1, %c0_i32, %c0_i32_0 : i32, i32, i32
  }
  func.func @transform_8(%arg0: i32, %arg1: i32) -> (i32, i32, i32) {
    %c0_i32 = arith.constant 0 : i32
    %c0_i32_0 = arith.constant 0 : i32
    %c0_i32_1 = arith.constant 0 : i32
    return %arg1, %c0_i32, %c0_i32_0 : i32, i32, i32
  }
  func.func @transform_9(%arg0: i32, %arg1: i32) -> (i32, i32, i32) {
    %c0_i32 = arith.constant 0 : i32
    %c0_i32_0 = arith.constant 0 : i32
    %c0_i32_1 = arith.constant 0 : i32
    return %arg1, %c0_i32, %c0_i32_0 : i32, i32, i32
  }
  func.func @transform_10(%arg0: i32, %arg1: i32) -> (i32, i32, i32) {
    %c0_i32 = arith.constant 0 : i32
    %c0_i32_0 = arith.constant 0 : i32
    %c0_i32_1 = arith.constant 0 : i32
    return %arg1, %c0_i32, %c0_i32_0 : i32, i32, i32
  }
  func.func @transform_11(%arg0: i32, %arg1: i32) -> (i32, i32, i32) {
    %c0_i32 = arith.constant 0 : i32
    %c0_i32_0 = arith.constant 0 : i32
    %c0_i32_1 = arith.constant 0 : i32
    return %arg1, %c0_i32, %c0_i32_0 : i32, i32, i32
  }
  func.func @transform_12(%arg0: i32, %arg1: i32) -> (i32, i32, i32) {
    %c0_i32 = arith.constant 0 : i32
    %c0_i32_0 = arith.constant 0 : i32
    %c0_i32_1 = arith.constant 0 : i32
    return %arg1, %c0_i32, %c0_i32_0 : i32, i32, i32
  }
  func.func @transform_13(%arg0: i32, %arg1: i32) -> (i32, i32, i32) {
    %c0_i32 = arith.constant 0 : i32
    %c0_i32_0 = arith.constant 0 : i32
    %c0_i32_1 = arith.constant 0 : i32
    return %arg1, %c0_i32, %c0_i32_0 : i32, i32, i32
  }
  func.func @transform_14(%arg0: i32, %arg1: i32) -> (i32, i32, i32) {
    %c0_i32 = arith.constant 0 : i32
    %c0_i32_0 = arith.constant 0 : i32
    %c0_i32_1 = arith.constant 0 : i32
    return %arg1, %c0_i32, %c0_i32_0 : i32, i32, i32
  }
  func.func @transform_15(%arg0: i32, %arg1: i32) -> (i32, i32, i32) {
    %c0_i32 = arith.constant 0 : i32
    %c0_i32_0 = arith.constant 0 : i32
    %c0_i32_1 = arith.constant 0 : i32
    return %arg1, %c0_i32, %c0_i32_0 : i32, i32, i32
  }
  func.func @transform_16(%arg0: i32, %arg1: i32) -> (i32, i32, i32) {
    %c0_i32 = arith.constant 0 : i32
    %c0_i32_0 = arith.constant 0 : i32
    %c0_i32_1 = arith.constant 0 : i32
    return %arg1, %c0_i32, %c0_i32_0 : i32, i32, i32
  }
  func.func @transform_17(%arg0: i32, %arg1: i32) -> (i32, i32) {
    %c0_i32 = arith.constant 0 : i32
    %c0_i32_0 = arith.constant 0 : i32
    %c0_i32_1 = arith.constant 0 : i32
    return %c0_i32, %c0_i32_0 : i32, i32
  }
  func.func @transform_18(%arg0: i32, %arg1: i32) -> (i32, i32) {
    %c0_i32 = arith.constant 0 : i32
    %c0_i32_0 = arith.constant 0 : i32
    %c0_i32_1 = arith.constant 0 : i32
    return %c0_i32, %c0_i32_0 : i32, i32
  }
  func.func @transform_19(%arg0: i32, %arg1: i32) -> (i32, i32) {
    %c0_i32 = arith.constant 0 : i32
    %c0_i32_0 = arith.constant 0 : i32
    %c0_i32_1 = arith.constant 0 : i32
    return %c0_i32, %c0_i32_0 : i32, i32
  }
  func.func @transform_20(%arg0: i32, %arg1: i32) -> (i32, i32) {
    %c0_i32 = arith.constant 0 : i32
    %c0_i32_0 = arith.constant 0 : i32
    %c0_i32_1 = arith.constant 0 : i32
    return %c0_i32, %c0_i32_0 : i32, i32
  }
  func.func @transform_21(%arg0: i32, %arg1: i32) -> (i32, i32, i32) {
    %c0_i32 = arith.constant 0 : i32
    %c0_i32_0 = arith.constant 0 : i32
    %c0_i32_1 = arith.constant 0 : i32
    return %arg0, %c0_i32, %c0_i32_0 : i32, i32, i32
  }
}

</mosaic_0001>

<llo_original>
// kernel: jepa_predictor_forward.1
$region0: #{jepa_predictor_forward.1}
  #allocation0 [shape = 'u32[]', space=smem, size = 0x4, offset = 0x4, fixed_abs, tag = 'smem constant byte address 0x4 - core index']
  #allocation1 [shape = 'u32[144,128]{1,0:T(1,128)}', space=vmem, size = 0x12000, scoped, tag = 'internal scratch']
  #allocation2 [shape = 'bf16[8,32]{1,0:T(8,128)(2,1)}', space=vmem, size = 0x800, scoped, tag = 'scratch operand']
  #allocation3 [shape = 'f32[4,32]{1,0:T(4,128)}', space=vmem, size = 0x800, scoped, tag = 'scratch operand']
  %s0 = inlined_call_operand.vmem [shape: f32[2,8,24], index: 0, kind: input, shape index: {}]
  %s1 = inlined_call_operand.vmem [shape: f32[2,4,32], index: 1, kind: input, shape index: {}]
  %s2 = inlined_call_operand.vmem [shape: bf16[24,32], index: 2, kind: input, shape index: {}]
  %s3 = inlined_call_operand.vmem [shape: f32[1,32], index: 3, kind: input, shape index: {}]
  %s4 = inlined_call_operand.vmem [shape: f32[1,32], index: 4, kind: input, shape index: {}]
  %s5 = inlined_call_operand.vmem [shape: f32[2,1,32], index: 5, kind: input, shape index: {}]
  %s6 = inlined_call_operand.vmem [shape: f32[2,1,32], index: 6, kind: input, shape index: {}]
  %s7 = inlined_call_operand.vmem [shape: bf16[2,32,32], index: 7, kind: input, shape index: {}]
  %s8 = inlined_call_operand.vmem [shape: bf16[2,32,64], index: 8, kind: input, shape index: {}]
  %s9 = inlined_call_operand.vmem [shape: bf16[2,32,32], index: 9, kind: input, shape index: {}]
  %s10 = inlined_call_operand.vmem [shape: f32[2,1,32], index: 10, kind: input, shape index: {}]
  %s11 = inlined_call_operand.vmem [shape: f32[2,1,32], index: 11, kind: input, shape index: {}]
  %s12 = inlined_call_operand.vmem [shape: f32[2,1,32], index: 12, kind: input, shape index: {}]
  %s13 = inlined_call_operand.vmem [shape: bf16[2,32,128], index: 13, kind: input, shape index: {}]
  %s14 = inlined_call_operand.vmem [shape: f32[2,1,128], index: 14, kind: input, shape index: {}]
  %s15 = inlined_call_operand.vmem [shape: bf16[2,128,32], index: 15, kind: input, shape index: {}]
  %s16 = inlined_call_operand.vmem [shape: f32[2,1,32], index: 16, kind: input, shape index: {}]
  %s17 = inlined_call_operand.vmem [shape: f32[1,32], index: 17, kind: input, shape index: {}]
  %s18 = inlined_call_operand.vmem [shape: f32[1,32], index: 18, kind: input, shape index: {}]
  %s19 = inlined_call_operand.vmem [shape: bf16[32,128], index: 19, kind: input, shape index: {}]
  %s20 = inlined_call_operand.vmem [shape: f32[1,128], index: 20, kind: input, shape index: {}]
  %s21 = inlined_call_operand.hbm [shape: f32[2,4,128], index: 21, kind: output, shape index: {}]
  %s22 = sld [smem:[#allocation0]]
  $region125: #{jepa_predictor_forward.1} parent=0
    _
  %s24 = ssub.s32 1, %s22
  %s25 = scalar_select 0, %s24, %s22
  $region1: #{jepa_predictor_forward.1} parent=0
    #allocation4 [shape = 'u8[4096]{0}', space=vmem, size = 0x1000, scoped, tag = 'output window, operand 0']
    #allocation5 [shape = 's32[2]{0}', space=sflag, size = 0x8, scoped, tag = 'scoped memory for jepa_predictor_forward.1']
    %26 = vsyncpa [#allocation5], 0
    %s27 = scalar_lea.sflag [#allocation5], 1
    %28 = vsyncpa %s27, 0
    loop: start=0, step=1, limit=6
    $region2: #{jepa_predictor_forward.1} parent=1 // loop_pre_header
      _
    $region3: #{jepa_predictor_forward.1} parent=1 // loop_header
      %s30 = sphi 0, %s34
      %p31 = scmp.ge.s32.totalorder %s30, 6
      %s37 = sphi 0, %s49
      %s38 = sphi 0, %s45
      %s39 = sphi 0, %s37
      %s40 = sphi 0, %s38
      %s41 = sphi 0, %s39
      %s42 = sphi 0, %s40
      %s52 = sphi 0, %s54
      %s55 = sphi 0, %s52
      %s56 = sphi 0, %s55
      %s72 = sphi 0, %s56
      %s78 = sphi 0, %s80
      %s81 = sphi 0, %s78
      %s82 = sphi 0, %s81
      %s98 = sphi 0, %s82
      %s102 = sphi 0, %s102
      %s104 = sphi 0, %s102
      %s105 = sphi 0, %s104
      %s119 = sphi 0, %s105
      %s123 = sphi 0, %s123
      %s125 = sphi 0, %s123
      %s126 = sphi 0, %s125
      %s140 = sphi 0, %s126
      %s144 = sphi 0, %s144
      %s146 = sphi 0, %s144
      %s147 = sphi 0, %s146
      %s161 = sphi 0, %s147
      %s167 = sphi 0, %s169
      %s170 = sphi 0, %s167
      %s171 = sphi 0, %s170
      %s187 = sphi 0, %s171
      %s193 = sphi 0, %s195
      %s196 = sphi 0, %s193
      %s197 = sphi 0, %s196
      %s213 = sphi 0, %s197
      %s219 = sphi 0, %s221
      %s222 = sphi 0, %s219
      %s223 = sphi 0, %s222
      %s239 = sphi 0, %s223
      %s245 = sphi 0, %s247
      %s248 = sphi 0, %s245
      %s249 = sphi 0, %s248
      %s265 = sphi 0, %s249
      %s271 = sphi 0, %s273
      %s274 = sphi 0, %s271
      %s275 = sphi 0, %s274
      %s291 = sphi 0, %s275
      %s297 = sphi 0, %s299
      %s300 = sphi 0, %s297
      %s301 = sphi 0, %s300
      %s317 = sphi 0, %s301
      %s323 = sphi 0, %s325
      %s326 = sphi 0, %s323
      %s327 = sphi 0, %s326
      %s343 = sphi 0, %s327
      %s349 = sphi 0, %s351
      %s352 = sphi 0, %s349
      %s353 = sphi 0, %s352
      %s369 = sphi 0, %s353
      %s375 = sphi 0, %s377
      %s378 = sphi 0, %s375
      %s379 = sphi 0, %s378
      %s395 = sphi 0, %s379
      %s401 = sphi 0, %s403
      %s404 = sphi 0, %s401
      %s405 = sphi 0, %s404
      %s421 = sphi 0, %s405
      %s427 = sphi 0, %s429
      %s430 = sphi 0, %s427
      %s431 = sphi 0, %s430
      %s447 = sphi 0, %s431
      %s453 = sphi 0, %s455
      %s456 = sphi 0, %s453
      %s457 = sphi 0, %s456
      %s473 = sphi 0, %s457
      %s477 = sphi 0, %s477
      %s479 = sphi 0, %s477
      %s480 = sphi 0, %s479
      %s494 = sphi 0, %s480
      %s498 = sphi 0, %s498
      %s500 = sphi 0, %s498
      %s501 = sphi 0, %s500
      %s515 = sphi 0, %s501
      %s519 = sphi 0, %s519
      %s521 = sphi 0, %s519
      %s522 = sphi 0, %s521
      %s536 = sphi 0, %s522
      %s540 = sphi 0, %s540
      %s542 = sphi 0, %s540
      %s543 = sphi 0, %s542
      %s557 = sphi 0, %s543
      %s563 = sphi 0, %s565
      %s566 = sphi 0, %s563
      %s567 = sphi 0, %s566
      %s583 = sphi 0, %s567
    $region4: #{jepa_predictor_forward.1} parent=1 // loop_header_branch
      %33 = sbr.rel (%p31) target = $region8
    $region5: #{jepa_predictor_forward.1} parent=1 // loop_body
      %s35 = ssub.s32 %s30, 1
      %s36 = ssub.s32 %s30, 2
      %s43 = sadd.s32 1, %s38
      %p44 = scmp.ge.s32.totalorder %s43, 2
      %s45 = scalar_select %p44, 0, %s43
      %s46 = sadd.s32 1, %s37
      %s47 = scalar_select %p44, %s46, %s37
      %p48 = scmp.ge.s32.totalorder %s47, 2
      %s49 = scalar_select %p48, 0, %s47
      %s50 = ssub.s32 %s37, %s49
      %p51 = scmp.eq.s32.totalorder %s50, 0
      %s53 = sadd.s32 %s52, 1
      %s54 = scalar_select %p51, %s52, %s53
      %p57 = pneg %p51
      %p58 = scmp.eq.s32.totalorder %s30, 3
      %p59 = por %p57, %p58
      %p60 = scmp.ne.s32.totalorder %s52, %s55
      %p61 = scmp.eq.s32.totalorder %s30, 0
      %p62 = por %p60, %p61
      %p63 = scmp.ne.s32.totalorder %s52, %s55
      %p64 = scmp.eq.s32.totalorder %s35, 3
      %p65 = por %p63, %p64
      %p66 = scmp.ne.s32.totalorder %s55, %s56
      %p67 = scmp.eq.s32.totalorder %s35, 0
      %p68 = por %p66, %p67
      %p69 = scmp.ne.s32.totalorder %s55, %s56
      %p70 = scmp.eq.s32.totalorder %s36, 3
      %p71 = por %p69, %p70
      %p73 = scmp.ne.s32.totalorder %s56, %s72
      %p74 = scmp.eq.s32.totalorder %s36, 0
      %p75 = por %p73, %p74
      %s76 = ssub.s32 %s37, %s49
      %p77 = scmp.eq.s32.totalorder %s76, 0
      %s79 = sadd.s32 %s78, 1
      %s80 = scalar_select %p77, %s78, %s79
      %p83 = pneg %p77
      %p84 = scmp.eq.s32.totalorder %s30, 3
      %p85 = por %p83, %p84
      %p86 = scmp.ne.s32.totalorder %s78, %s81
      %p87 = scmp.eq.s32.totalorder %s30, 0
      %p88 = por %p86, %p87
      %p89 = scmp.ne.s32.totalorder %s78, %s81
      %p90 = scmp.eq.s32.totalorder %s35, 3
      %p91 = por %p89, %p90
      %p92 = scmp.ne.s32.totalorder %s81, %s82
      %p93 = scmp.eq.s32.totalorder %s35, 0
      %p94 = por %p92, %p93
      %p95 = scmp.ne.s32.totalorder %s81, %s82
      %p96 = scmp.eq.s32.totalorder %s36, 3
      %p97 = por %p95, %p96
      %p99 = scmp.ne.s32.totalorder %s82, %s98
      %p100 = scmp.eq.s32.totalorder %s36, 0
      %p101 = por %p99, %p100
      %s103 = sadd.s32 %s102, 1
      %p106 = scmp.eq.s32.totalorder %s30, 3
      %p107 = scmp.ne.s32.totalorder %s102, %s104
      %p108 = scmp.eq.s32.totalorder %s30, 0
      %p109 = por %p107, %p108
      %p110 = scmp.ne.s32.totalorder %s102, %s104
      %p111 = scmp.eq.s32.totalorder %s35, 3
      %p112 = por %p110, %p111
      %p113 = scmp.ne.s32.totalorder %s104, %s105
      %p114 = scmp.eq.s32.totalorder %s35, 0
      %p115 = por %p113, %p114
      %p116 = scmp.ne.s32.totalorder %s104, %s105
      %p117 = scmp.eq.s32.totalorder %s36, 3
      %p118 = por %p116, %p117
      %p120 = scmp.ne.s32.totalorder %s105, %s119
      %p121 = scmp.eq.s32.totalorder %s36, 0
      %p122 = por %p120, %p121
      %s124 = sadd.s32 %s123, 1
      %p127 = scmp.eq.s32.totalorder %s30, 3
      %p128 = scmp.ne.s32.totalorder %s123, %s125
      %p129 = scmp.eq.s32.totalorder %s30, 0
      %p130 = por %p128, %p129
      %p131 = scmp.ne.s32.totalorder %s123, %s125
      %p132 = scmp.eq.s32.totalorder %s35, 3
      %p133 = por %p131, %p132
      %p134 = scmp.ne.s32.totalorder %s125, %s126
      %p135 = scmp.eq.s32.totalorder %s35, 0
      %p136 = por %p134, %p135
      %p137 = scmp.ne.s32.totalorder %s125, %s126
      %p138 = scmp.eq.s32.totalorder %s36, 3
      %p139 = por %p137, %p138
      %p141 = scmp.ne.s32.totalorder %s126, %s140
      %p142 = scmp.eq.s32.totalorder %s36, 0
      %p143 = por %p141, %p142
      %s145 = sadd.s32 %s144, 1
      %p148 = scmp.eq.s32.totalorder %s30, 3
      %p149 = scmp.ne.s32.totalorder %s144, %s146
      %p150 = scmp.eq.s32.totalorder %s30, 0
      %p151 = por %p149, %p150
      %p152 = scmp.ne.s32.totalorder %s144, %s146
      %p153 = scmp.eq.s32.totalorder %s35, 3
      %p154 = por %p152, %p153
      %p155 = scmp.ne.s32.totalorder %s146, %s147
      %p156 = scmp.eq.s32.totalorder %s35, 0
      %p157 = por %p155, %p156
      %p158 = scmp.ne.s32.totalorder %s146, %s147
      %p159 = scmp.eq.s32.totalorder %s36, 3
      %p160 = por %p158, %p159
      %p162 = scmp.ne.s32.totalorder %s147, %s161
      %p163 = scmp.eq.s32.totalorder %s36, 0
      %p164 = por %p162, %p163
      %s165 = ssub.s32 %s38, %s45
      %p166 = scmp.eq.s32.totalorder %s165, 0
      %s168 = sadd.s32 %s167, 1
      %s169 = scalar_select %p166, %s167, %s168
      %p172 = pneg %p166
      %p173 = scmp.eq.s32.totalorder %s30, 3
      %p174 = por %p172, %p173
      %p175 = scmp.ne.s32.totalorder %s167, %s170
      %p176 = scmp.eq.s32.totalorder %s30, 0
      %p177 = por %p175, %p176
      %p178 = scmp.ne.s32.totalorder %s167, %s170
      %p179 = scmp.eq.s32.totalorder %s35, 3
      %p180 = por %p178, %p179
      %p181 = scmp.ne.s32.totalorder %s170, %s171
      %p182 = scmp.eq.s32.totalorder %s35, 0
      %p183 = por %p181, %p182
      %p184 = scmp.ne.s32.totalorder %s170, %s171
      %p185 = scmp.eq.s32.totalorder %s36, 3
      %p186 = por %p184, %p185
      %p188 = scmp.ne.s32.totalorder %s171, %s187
      %p189 = scmp.eq.s32.totalorder %s36, 0
      %p190 = por %p188, %p189
      %s191 = ssub.s32 %s38, %s45
      %p192 = scmp.eq.s32.totalorder %s191, 0
      %s194 = sadd.s32 %s193, 1
      %s195 = scalar_select %p192, %s193, %s194
      %p198 = pneg %p192
      %p199 = scmp.eq.s32.totalorder %s30, 3
      %p200 = por %p198, %p199
      %p201 = scmp.ne.s32.totalorder %s193, %s196
      %p202 = scmp.eq.s32.totalorder %s30, 0
      %p203 = por %p201, %p202
      %p204 = scmp.ne.s32.totalorder %s193, %s196
      %p205 = scmp.eq.s32.totalorder %s35, 3
      %p206 = por %p204, %p205
      %p207 = scmp.ne.s32.totalorder %s196, %s197
      %p208 = scmp.eq.s32.totalorder %s35, 0
      %p209 = por %p207, %p208
      %p210 = scmp.ne.s32.totalorder %s196, %s197
      %p211 = scmp.eq.s32.totalorder %s36, 3
      %p212 = por %p210, %p211
      %p214 = scmp.ne.s32.totalorder %s197, %s213
      %p215 = scmp.eq.s32.totalorder %s36, 0
      %p216 = por %p214, %p215
      %s217 = ssub.s32 %s38, %s45
      %p218 = scmp.eq.s32.totalorder %s217, 0
      %s220 = sadd.s32 %s219, 1
      %s221 = scalar_select %p218, %s219, %s220
      %p224 = pneg %p218
      %p225 = scmp.eq.s32.totalorder %s30, 3
      %p226 = por %p224, %p225
      %p227 = scmp.ne.s32.totalorder %s219, %s222
      %p228 = scmp.eq.s32.totalorder %s30, 0
      %p229 = por %p227, %p228
      %p230 = scmp.ne.s32.totalorder %s219, %s222
      %p231 = scmp.eq.s32.totalorder %s35, 3
      %p232 = por %p230, %p231
      %p233 = scmp.ne.s32.totalorder %s222, %s223
      %p234 = scmp.eq.s32.totalorder %s35, 0
      %p235 = por %p233, %p234
      %p236 = scmp.ne.s32.totalorder %s222, %s223
      %p237 = scmp.eq.s32.totalorder %s36, 3
      %p238 = por %p236, %p237
      %p240 = scmp.ne.s32.totalorder %s223, %s239
      %p241 = scmp.eq.s32.totalorder %s36, 0
      %p242 = por %p240, %p241
      %s243 = ssub.s32 %s38, %s45
      %p244 = scmp.eq.s32.totalorder %s243, 0
      %s246 = sadd.s32 %s245, 1
      %s247 = scalar_select %p244, %s245, %s246
      %p250 = pneg %p244
      %p251 = scmp.eq.s32.totalorder %s30, 3
      %p252 = por %p250, %p251
      %p253 = scmp.ne.s32.totalorder %s245, %s248
      %p254 = scmp.eq.s32.totalorder %s30, 0
      %p255 = por %p253, %p254
      %p256 = scmp.ne.s32.totalorder %s245, %s248
      %p257 = scmp.eq.s32.totalorder %s35, 3
      %p258 = por %p256, %p257
      %p259 = scmp.ne.s32.totalorder %s248, %s249
      %p260 = scmp.eq.s32.totalorder %s35, 0
      %p261 = por %p259, %p260
      %p262 = scmp.ne.s32.totalorder %s248, %s249
      %p263 = scmp.eq.s32.totalorder %s36, 3
      %p264 = por %p262, %p263
      %p266 = scmp.ne.s32.totalorder %s249, %s265
      %p267 = scmp.eq.s32.totalorder %s36, 0
      %p268 = por %p266, %p267
      %s269 = ssub.s32 %s38, %s45
      %p270 = scmp.eq.s32.totalorder %s269, 0
      %s272 = sadd.s32 %s271, 1
      %s273 = scalar_select %p270, %s271, %s272
      %p276 = pneg %p270
      %p277 = scmp.eq.s32.totalorder %s30, 3
      %p278 = por %p276, %p277
      %p279 = scmp.ne.s32.totalorder %s271, %s274
      %p280 = scmp.eq.s32.totalorder %s30, 0
      %p281 = por %p279, %p280
      %p282 = scmp.ne.s32.totalorder %s271, %s274
      %p283 = scmp.eq.s32.totalorder %s35, 3
      %p284 = por %p282, %p283
      %p285 = scmp.ne.s32.totalorder %s274, %s275
      %p286 = scmp.eq.s32.totalorder %s35, 0
      %p287 = por %p285, %p286
      %p288 = scmp.ne.s32.totalorder %s274, %s275
      %p289 = scmp.eq.s32.totalorder %s36, 3
      %p290 = por %p288, %p289
      %p292 = scmp.ne.s32.totalorder %s275, %s291
      %p293 = scmp.eq.s32.totalorder %s36, 0
      %p294 = por %p292, %p293
      %s295 = ssub.s32 %s38, %s45
      %p296 = scmp.eq.s32.totalorder %s295, 0
      %s298 = sadd.s32 %s297, 1
      %s299 = scalar_select %p296, %s297, %s298
      %p302 = pneg %p296
      %p303 = scmp.eq.s32.totalorder %s30, 3
      %p304 = por %p302, %p303
      %p305 = scmp.ne.s32.totalorder %s297, %s300
      %p306 = scmp.eq.s32.totalorder %s30, 0
      %p307 = por %p305, %p306
      %p308 = scmp.ne.s32.totalorder %s297, %s300
      %p309 = scmp.eq.s32.totalorder %s35, 3
      %p310 = por %p308, %p309
      %p311 = scmp.ne.s32.totalorder %s300, %s301
      %p312 = scmp.eq.s32.totalorder %s35, 0
      %p313 = por %p311, %p312
      %p314 = scmp.ne.s32.totalorder %s300, %s301
      %p315 = scmp.eq.s32.totalorder %s36, 3
      %p316 = por %p314, %p315
      %p318 = scmp.ne.s32.totalorder %s301, %s317
      %p319 = scmp.eq.s32.totalorder %s36, 0
      %p320 = por %p318, %p319
      %s321 = ssub.s32 %s38, %s45
      %p322 = scmp.eq.s32.totalorder %s321, 0
      %s324 = sadd.s32 %s323, 1
      %s325 = scalar_select %p322, %s323, %s324
      %p328 = pneg %p322
      %p329 = scmp.eq.s32.totalorder %s30, 3
      %p330 = por %p328, %p329
      %p331 = scmp.ne.s32.totalorder %s323, %s326
      %p332 = scmp.eq.s32.totalorder %s30, 0
      %p333 = por %p331, %p332
      %p334 = scmp.ne.s32.totalorder %s323, %s326
      %p335 = scmp.eq.s32.totalorder %s35, 3
      %p336 = por %p334, %p335
      %p337 = scmp.ne.s32.totalorder %s326, %s327
      %p338 = scmp.eq.s32.totalorder %s35, 0
      %p339 = por %p337, %p338
      %p340 = scmp.ne.s32.totalorder %s326, %s327
      %p341 = scmp.eq.s32.totalorder %s36, 3
      %p342 = por %p340, %p341
      %p344 = scmp.ne.s32.totalorder %s327, %s343
      %p345 = scmp.eq.s32.totalorder %s36, 0
      %p346 = por %p344, %p345
      %s347 = ssub.s32 %s38, %s45
      %p348 = scmp.eq.s32.totalorder %s347, 0
      %s350 = sadd.s32 %s349, 1
      %s351 = scalar_select %p348, %s349, %s350
      %p354 = pneg %p348
      %p355 = scmp.eq.s32.totalorder %s30, 3
      %p356 = por %p354, %p355
      %p357 = scmp.ne.s32.totalorder %s349, %s352
      %p358 = scmp.eq.s32.totalorder %s30, 0
      %p359 = por %p357, %p358
      %p360 = scmp.ne.s32.totalorder %s349, %s352
      %p361 = scmp.eq.s32.totalorder %s35, 3
      %p362 = por %p360, %p361
      %p363 = scmp.ne.s32.totalorder %s352, %s353
      %p364 = scmp.eq.s32.totalorder %s35, 0
      %p365 = por %p363, %p364
      %p366 = scmp.ne.s32.totalorder %s352, %s353
      %p367 = scmp.eq.s32.totalorder %s36, 3
      %p368 = por %p366, %p367
      %p370 = scmp.ne.s32.totalorder %s353, %s369
      %p371 = scmp.eq.s32.totalorder %s36, 0
      %p372 = por %p370, %p371
      %s373 = ssub.s32 %s38, %s45
      %p374 = scmp.eq.s32.totalorder %s373, 0
      %s376 = sadd.s32 %s375, 1
      %s377 = scalar_select %p374, %s375, %s376
      %p380 = pneg %p374
      %p381 = scmp.eq.s32.totalorder %s30, 3
      %p382 = por %p380, %p381
      %p383 = scmp.ne.s32.totalorder %s375, %s378
      %p384 = scmp.eq.s32.totalorder %s30, 0
      %p385 = por %p383, %p384
      %p386 = scmp.ne.s32.totalorder %s375, %s378
      %p387 = scmp.eq.s32.totalorder %s35, 3
      %p388 = por %p386, %p387
      %p389 = scmp.ne.s32.totalorder %s378, %s379
      %p390 = scmp.eq.s32.totalorder %s35, 0
      %p391 = por %p389, %p390
      %p392 = scmp.ne.s32.totalorder %s378, %s379
      %p393 = scmp.eq.s32.totalorder %s36, 3
      %p394 = por %p392, %p393
      %p396 = scmp.ne.s32.totalorder %s379, %s395
      %p397 = scmp.eq.s32.totalorder %s36, 0
      %p398 = por %p396, %p397
      %s399 = ssub.s32 %s38, %s45
      %p400 = scmp.eq.s32.totalorder %s399, 0
      %s402 = sadd.s32 %s401, 1
      %s403 = scalar_select %p400, %s401, %s402
      %p406 = pneg %p400
      %p407 = scmp.eq.s32.totalorder %s30, 3
      %p408 = por %p406, %p407
      %p409 = scmp.ne.s32.totalorder %s401, %s404
      %p410 = scmp.eq.s32.totalorder %s30, 0
      %p411 = por %p409, %p410
      %p412 = scmp.ne.s32.totalorder %s401, %s404
      %p413 = scmp.eq.s32.totalorder %s35, 3
      %p414 = por %p412, %p413
      %p415 = scmp.ne.s32.totalorder %s404, %s405
      %p416 = scmp.eq.s32.totalorder %s35, 0
      %p417 = por %p415, %p416
      %p418 = scmp.ne.s32.totalorder %s404, %s405
      %p419 = scmp.eq.s32.totalorder %s36, 3
      %p420 = por %p418, %p419
      %p422 = scmp.ne.s32.totalorder %s405, %s421
      %p423 = scmp.eq.s32.totalorder %s36, 0
      %p424 = por %p422, %p423
      %s425 = ssub.s32 %s38, %s45
      %p426 = scmp.eq.s32.totalorder %s425, 0
      %s428 = sadd.s32 %s427, 1
      %s429 = scalar_select %p426, %s427, %s428
      %p432 = pneg %p426
      %p433 = scmp.eq.s32.totalorder %s30, 3
      %p434 = por %p432, %p433
      %p435 = scmp.ne.s32.totalorder %s427, %s430
      %p436 = scmp.eq.s32.totalorder %s30, 0
      %p437 = por %p435, %p436
      %p438 = scmp.ne.s32.totalorder %s427, %s430
      %p439 = scmp.eq.s32.totalorder %s35, 3
      %p440 = por %p438, %p439
      %p441 = scmp.ne.s32.totalorder %s430, %s431
      %p442 = scmp.eq.s32.totalorder %s35, 0
      %p443 = por %p441, %p442
      %p444 = scmp.ne.s32.totalorder %s430, %s431
      %p445 = scmp.eq.s32.totalorder %s36, 3
      %p446 = por %p444, %p445
      %p448 = scmp.ne.s32.totalorder %s431, %s447
      %p449 = scmp.eq.s32.totalorder %s36, 0
      %p450 = por %p448, %p449
      %s451 = ssub.s32 %s38, %s45
      %p452 = scmp.eq.s32.totalorder %s451, 0
      %s454 = sadd.s32 %s453, 1
      %s455 = scalar_select %p452, %s453, %s454
      %p458 = pneg %p452
      %p459 = scmp.eq.s32.totalorder %s30, 3
      %p460 = por %p458, %p459
      %p461 = scmp.ne.s32.totalorder %s453, %s456
      %p462 = scmp.eq.s32.totalorder %s30, 0
      %p463 = por %p461, %p462
      %p464 = scmp.ne.s32.totalorder %s453, %s456
      %p465 = scmp.eq.s32.totalorder %s35, 3
      %p466 = por %p464, %p465
      %p467 = scmp.ne.s32.totalorder %s456, %s457
      %p468 = scmp.eq.s32.totalorder %s35, 0
      %p469 = por %p467, %p468
      %p470 = scmp.ne.s32.totalorder %s456, %s457
      %p471 = scmp.eq.s32.totalorder %s36, 3
      %p472 = por %p470, %p471
      %p474 = scmp.ne.s32.totalorder %s457, %s473
      %p475 = scmp.eq.s32.totalorder %s36, 0
      %p476 = por %p474, %p475
      %s478 = sadd.s32 %s477, 1
      %p481 = scmp.eq.s32.totalorder %s30, 3
      %p482 = scmp.ne.s32.totalorder %s477, %s479
      %p483 = scmp.eq.s32.totalorder %s30, 0
      %p484 = por %p482, %p483
      %p485 = scmp.ne.s32.totalorder %s477, %s479
      %p486 = scmp.eq.s32.totalorder %s35, 3
      %p487 = por %p485, %p486
      %p488 = scmp.ne.s32.totalorder %s479, %s480
      %p489 = scmp.eq.s32.totalorder %s35, 0
      %p490 = por %p488, %p489
      %p491 = scmp.ne.s32.totalorder %s479, %s480
      %p492 = scmp.eq.s32.totalorder %s36, 3
      %p493 = por %p491, %p492
      %p495 = scmp.ne.s32.totalorder %s480, %s494
      %p496 = scmp.eq.s32.totalorder %s36, 0
      %p497 = por %p495, %p496
      %s499 = sadd.s32 %s498, 1
      %p502 = scmp.eq.s32.totalorder %s30, 3
      %p503 = scmp.ne.s32.totalorder %s498, %s500
      %p504 = scmp.eq.s32.totalorder %s30, 0
      %p505 = por %p503, %p504
      %p506 = scmp.ne.s32.totalorder %s498, %s500
      %p507 = scmp.eq.s32.totalorder %s35, 3
      %p508 = por %p506, %p507
      %p509 = scmp.ne.s32.totalorder %s500, %s501
      %p510 = scmp.eq.s32.totalorder %s35, 0
      %p511 = por %p509, %p510
      %p512 = scmp.ne.s32.totalorder %s500, %s501
      %p513 = scmp.eq.s32.totalorder %s36, 3
      %p514 = por %p512, %p513
      %p516 = scmp.ne.s32.totalorder %s501, %s515
      %p517 = scmp.eq.s32.totalorder %s36, 0
      %p518 = por %p516, %p517
      %s520 = sadd.s32 %s519, 1
      %p523 = scmp.eq.s32.totalorder %s30, 3
      %p524 = scmp.ne.s32.totalorder %s519, %s521
      %p525 = scmp.eq.s32.totalorder %s30, 0
      %p526 = por %p524, %p525
      %p527 = scmp.ne.s32.totalorder %s519, %s521
      %p528 = scmp.eq.s32.totalorder %s35, 3
      %p529 = por %p527, %p528
      %p530 = scmp.ne.s32.totalorder %s521, %s522
      %p531 = scmp.eq.s32.totalorder %s35, 0
      %p532 = por %p530, %p531
      %p533 = scmp.ne.s32.totalorder %s521, %s522
      %p534 = scmp.eq.s32.totalorder %s36, 3
      %p535 = por %p533, %p534
      %p537 = scmp.ne.s32.totalorder %s522, %s536
      %p538 = scmp.eq.s32.totalorder %s36, 0
      %p539 = por %p537, %p538
      %s541 = sadd.s32 %s540, 1
      %p544 = scmp.eq.s32.totalorder %s30, 3
      %p545 = scmp.ne.s32.totalorder %s540, %s542
      %p546 = scmp.eq.s32.totalorder %s30, 0
      %p547 = por %p545, %p546
      %p548 = scmp.ne.s32.totalorder %s540, %s542
      %p549 = scmp.eq.s32.totalorder %s35, 3
      %p550 = por %p548, %p549
      %p551 = scmp.ne.s32.totalorder %s542, %s543
      %p552 = scmp.eq.s32.totalorder %s35, 0
      %p553 = por %p551, %p552
      %p554 = scmp.ne.s32.totalorder %s542, %s543
      %p555 = scmp.eq.s32.totalorder %s36, 3
      %p556 = por %p554, %p555
      %p558 = scmp.ne.s32.totalorder %s543, %s557
      %p559 = scmp.eq.s32.totalorder %s36, 0
      %p560 = por %p558, %p559
      %s561 = ssub.s32 %s37, %s49
      %p562 = scmp.eq.s32.totalorder %s561, 0
      %s564 = sadd.s32 %s563, 1
      %s565 = scalar_select %p562, %s563, %s564
      %p568 = pneg %p562
      %p569 = scmp.eq.s32.totalorder %s30, 3
      %p570 = por %p568, %p569
      %p571 = scmp.ne.s32.totalorder %s563, %s566
      %p572 = scmp.eq.s32.totalorder %s30, 0
      %p573 = por %p571, %p572
      %p574 = scmp.ne.s32.totalorder %s563, %s566
      %p575 = scmp.eq.s32.totalorder %s35, 3
      %p576 = por %p574, %p575
      %p577 = scmp.ne.s32.totalorder %s566, %s567
      %p578 = scmp.eq.s32.totalorder %s35, 0
      %p579 = por %p577, %p578
      %p580 = scmp.ne.s32.totalorder %s566, %s567
      %p581 = scmp.eq.s32.totalorder %s36, 3
      %p582 = por %p580, %p581
      %p584 = scmp.ne.s32.totalorder %s567, %s583
      %p585 = scmp.eq.s32.totalorder %s36, 0
      %p586 = por %p584, %p585
      %p587 = scmp.le.s32.totalorder 1, %s30
      %p588 = scmp.lt.s32.totalorder %s30, 5
      %p589 = pnand %p587, %p588
      %p590 = pneg %p589
      // Predicated region
      $region9: #{jepa_predictor_forward.1} parent=5 // pred_check
        _
      $region10: #{jepa_predictor_forward.1} parent=5 // pred_check_branch
        %592 = sbr.rel (%p589) target = $region12
      $region11: #{jepa_predictor_forward.1} parent=5 // pred_region
        %s593 = ssub.s32 %s30, 1
        // Predicated region
        $region13: #{jepa_predictor_forward.1} parent=11 // pred_check
          %p594 = pneg %p115
        $region14: #{jepa_predictor_forward.1} parent=11 // pred_check_branch
          %596 = sbr.rel (%p594) target = $region16
        $region15: #{jepa_predictor_forward.1} parent=11 // pred_region
          _
        $region16: #{jepa_predictor_forward.1} parent=11 // pred_fallthru
          _
        // Predicated region
        $region17: #{jepa_predictor_forward.1} parent=11 // pred_check
          %p597 = pneg %p136
        $region18: #{jepa_predictor_forward.1} parent=11 // pred_check_branch
          %599 = sbr.rel (%p597) target = $region20
        $region19: #{jepa_predictor_forward.1} parent=11 // pred_region
          _
        $region20: #{jepa_predictor_forward.1} parent=11 // pred_fallthru
          _
        // Predicated region
        $region21: #{jepa_predictor_forward.1} parent=11 // pred_check
          %p600 = pneg %p157
        $region22: #{jepa_predictor_forward.1} parent=11 // pred_check_branch
          %602 = sbr.rel (%p600) target = $region24
        $region23: #{jepa_predictor_forward.1} parent=11 // pred_region
          _
        $region24: #{jepa_predictor_forward.1} parent=11 // pred_fallthru
          _
        // Predicated region
        $region25: #{jepa_predictor_forward.1} parent=11 // pred_check
          %p603 = pneg %p490
        $region26: #{jepa_predictor_forward.1} parent=11 // pred_check_branch
          %605 = sbr.rel (%p603) target = $region28
        $region27: #{jepa_predictor_forward.1} parent=11 // pred_region
          _
        $region28: #{jepa_predictor_forward.1} parent=11 // pred_fallthru
          _
        // Predicated region
        $region29: #{jepa_predictor_forward.1} parent=11 // pred_check
          %p606 = pneg %p511
        $region30: #{jepa_predictor_forward.1} parent=11 // pred_check_branch
          %608 = sbr.rel (%p606) target = $region32
        $region31: #{jepa_predictor_forward.1} parent=11 // pred_region
          _
        $region32: #{jepa_predictor_forward.1} parent=11 // pred_fallthru
          _
        // Predicated region
        $region33: #{jepa_predictor_forward.1} parent=11 // pred_check
          %p609 = pneg %p532
        $region34: #{jepa_predictor_forward.1} parent=11 // pred_check_branch
          %611 = sbr.rel (%p609) target = $region36
        $region35: #{jepa_predictor_forward.1} parent=11 // pred_region
          _
        $region36: #{jepa_predictor_forward.1} parent=11 // pred_fallthru
          _
        // Predicated region
        $region37: #{jepa_predictor_forward.1} parent=11 // pred_check
          %p612 = pneg %p553
        $region38: #{jepa_predictor_forward.1} parent=11 // pred_check_branch
          %614 = sbr.rel (%p612) target = $region40
        $region39: #{jepa_predictor_forward.1} parent=11 // pred_region
          _
        $region40: #{jepa_predictor_forward.1} parent=11 // pred_fallthru
          _
      $region12: #{jepa_predictor_forward.1} parent=5 // pred_fallthru
        _
      %p615 = scmp.lt.s32.totalorder %s30, 4
      // Predicated region
      $region41: #{jepa_predictor_forward.1} parent=5 // pred_check
        %p616 = pneg %p615
      $region42: #{jepa_predictor_forward.1} parent=5 // pred_check_branch
        %618 = sbr.rel (%p616) target = $region44
      $region43: #{jepa_predictor_forward.1} parent=5 // pred_region
        // Predicated region
        $region45: #{jepa_predictor_forward.1} parent=43 // pred_check
          %p619 = pneg %p62
        $region46: #{jepa_predictor_forward.1} parent=43 // pred_check_branch
          %621 = sbr.rel (%p619) target = $region48
        $region47: #{jepa_predictor_forward.1} parent=43 // pred_region
          %p622 = scmp.lt.s32.totalorder %s37, 1
          %s623 = scalar_select %p622, %s37, 1
          %s624 = smul.addr %s623, 8
          %s625 = scalar_lea.vmem %s0, %s624
        $region48: #{jepa_predictor_forward.1} parent=43 // pred_fallthru
          _
        // Predicated region
        $region49: #{jepa_predictor_forward.1} parent=43 // pred_check
          %p626 = pneg %p88
        $region50: #{jepa_predictor_forward.1} parent=43 // pred_check_branch
          %628 = sbr.rel (%p626) target = $region52
        $region51: #{jepa_predictor_forward.1} parent=43 // pred_region
          %p629 = scmp.lt.s32.totalorder %s37, 1
          %s630 = scalar_select %p629, %s37, 1
          %s631 = smul.addr %s630, 4
          %s632 = scalar_lea.vmem %s1, %s631
        $region52: #{jepa_predictor_forward.1} parent=43 // pred_fallthru
          _
        // Predicated region
        $region53: #{jepa_predictor_forward.1} parent=43 // pred_check
          %p633 = pneg %p177
        $region54: #{jepa_predictor_forward.1} parent=43 // pred_check_branch
          %635 = sbr.rel (%p633) target = $region56
        $region55: #{jepa_predictor_forward.1} parent=43 // pred_region
          %p636 = scmp.lt.s32.totalorder %s38, 1
          %s637 = scalar_select %p636, %s38, 1
          %s638 = scalar_lea.vmem %s5, %s637
        $region56: #{jepa_predictor_forward.1} parent=43 // pred_fallthru
          _
        // Predicated region
        $region57: #{jepa_predictor_forward.1} parent=43 // pred_check
          %p639 = pneg %p203
        $region58: #{jepa_predictor_forward.1} parent=43 // pred_check_branch
          %641 = sbr.rel (%p639) target = $region60
        $region59: #{jepa_predictor_forward.1} parent=43 // pred_region
          %p642 = scmp.lt.s32.totalorder %s38, 1
          %s643 = scalar_select %p642, %s38, 1
          %s644 = scalar_lea.vmem %s6, %s643
        $region60: #{jepa_predictor_forward.1} parent=43 // pred_fallthru
          _
        // Predicated region
        $region61: #{jepa_predictor_forward.1} parent=43 // pred_check
          %p645 = pneg %p229
        $region62: #{jepa_predictor_forward.1} parent=43 // pred_check_branch
          %647 = sbr.rel (%p645) target = $region64
        $region63: #{jepa_predictor_forward.1} parent=43 // pred_region
          %p648 = scmp.lt.s32.totalorder %s38, 1
          %s649 = scalar_select %p648, %s38, 1
          %s650 = smul.addr %s649, 4
          %s651 = smul.addr %s650, 4
          %s652 = scalar_lea.vmem %s7, %s651
        $region64: #{jepa_predictor_forward.1} parent=43 // pred_fallthru
          _
        // Predicated region
        $region65: #{jepa_predictor_forward.1} parent=43 // pred_check
          %p653 = pneg %p255
        $region66: #{jepa_predictor_forward.1} parent=43 // pred_check_branch
          %655 = sbr.rel (%p653) target = $region68
        $region67: #{jepa_predictor_forward.1} parent=43 // pred_region
          %p656 = scmp.lt.s32.totalorder %s38, 1
          %s657 = scalar_select %p656, %s38, 1
          %s658 = smul.addr %s657, 4
          %s659 = smul.addr %s658, 4
          %s660 = scalar_lea.vmem %s8, %s659
        $region68: #{jepa_predictor_forward.1} parent=43 // pred_fallthru
          _
        // Predicated region
        $region69: #{jepa_predictor_forward.1} parent=43 // pred_check
          %p661 = pneg %p281
        $region70: #{jepa_predictor_forward.1} parent=43 // pred_check_branch
          %663 = sbr.rel (%p661) target = $region72
        $region71: #{jepa_predictor_forward.1} parent=43 // pred_region
          %p664 = scmp.lt.s32.totalorder %s38, 1
          %s665 = scalar_select %p664, %s38, 1
          %s666 = smul.addr %s665, 4
          %s667 = smul.addr %s666, 4
          %s668 = scalar_lea.vmem %s9, %s667
        $region72: #{jepa_predictor_forward.1} parent=43 // pred_fallthru
          _
        // Predicated region
        $region73: #{jepa_predictor_forward.1} parent=43 // pred_check
          %p669 = pneg %p307
        $region74: #{jepa_predictor_forward.1} parent=43 // pred_check_branch
          %671 = sbr.rel (%p669) target = $region76
        $region75: #{jepa_predictor_forward.1} parent=43 // pred_region
          %p672 = scmp.lt.s32.totalorder %s38, 1
          %s673 = scalar_select %p672, %s38, 1
          %s674 = scalar_lea.vmem %s10, %s673
        $region76: #{jepa_predictor_forward.1} parent=43 // pred_fallthru
          _
        // Predicated region
        $region77: #{jepa_predictor_forward.1} parent=43 // pred_check
          %p675 = pneg %p333
        $region78: #{jepa_predictor_forward.1} parent=43 // pred_check_branch
          %677 = sbr.rel (%p675) target = $region80
        $region79: #{jepa_predictor_forward.1} parent=43 // pred_region
          %p678 = scmp.lt.s32.totalorder %s38, 1
          %s679 = scalar_select %p678, %s38, 1
          %s680 = scalar_lea.vmem %s11, %s679
        $region80: #{jepa_predictor_forward.1} parent=43 // pred_fallthru
          _
        // Predicated region
        $region81: #{jepa_predictor_forward.1} parent=43 // pred_check
          %p681 = pneg %p359
        $region82: #{jepa_predictor_forward.1} parent=43 // pred_check_branch
          %683 = sbr.rel (%p681) target = $region84
        $region83: #{jepa_predictor_forward.1} parent=43 // pred_region
          %p684 = scmp.lt.s32.totalorder %s38, 1
          %s685 = scalar_select %p684, %s38, 1
          %s686 = scalar_lea.vmem %s12, %s685
        $region84: #{jepa_predictor_forward.1} parent=43 // pred_fallthru
          _
        // Predicated region
        $region85: #{jepa_predictor_forward.1} parent=43 // pred_check
          %p687 = pneg %p385
        $region86: #{jepa_predictor_forward.1} parent=43 // pred_check_branch
          %689 = sbr.rel (%p687) target = $region88
        $region87: #{jepa_predictor_forward.1} parent=43 // pred_region
          %p690 = scmp.lt.s32.totalorder %s38, 1
          %s691 = scalar_select %p690, %s38, 1
          %s692 = smul.addr %s691, 4
          %s693 = smul.addr %s692, 4
          %s694 = scalar_lea.vmem %s13, %s693
        $region88: #{jepa_predictor_forward.1} parent=43 // pred_fallthru
          _
        // Predicated region
        $region89: #{jepa_predictor_forward.1} parent=43 // pred_check
          %p695 = pneg %p411
        $region90: #{jepa_predictor_forward.1} parent=43 // pred_check_branch
          %697 = sbr.rel (%p695) target = $region92
        $region91: #{jepa_predictor_forward.1} parent=43 // pred_region
          %p698 = scmp.lt.s32.totalorder %s38, 1
          %s699 = scalar_select %p698, %s38, 1
          %s700 = scalar_lea.vmem %s14, %s699
        $region92: #{jepa_predictor_forward.1} parent=43 // pred_fallthru
          _
        // Predicated region
        $region93: #{jepa_predictor_forward.1} parent=43 // pred_check
          %p701 = pneg %p437
        $region94: #{jepa_predictor_forward.1} parent=43 // pred_check_branch
          %703 = sbr.rel (%p701) target = $region96
        $region95: #{jepa_predictor_forward.1} parent=43 // pred_region
          %p704 = scmp.lt.s32.totalorder %s38, 1
          %s705 = scalar_select %p704, %s38, 1
          %s706 = smul.addr %s705, 16
          %s707 = smul.addr %s706, 4
          %s708 = scalar_lea.vmem %s15, %s707
        $region96: #{jepa_predictor_forward.1} parent=43 // pred_fallthru
          _
        // Predicated region
        $region97: #{jepa_predictor_forward.1} parent=43 // pred_check
          %p709 = pneg %p463
        $region98: #{jepa_predictor_forward.1} parent=43 // pred_check_branch
          %711 = sbr.rel (%p709) target = $region100
        $region99: #{jepa_predictor_forward.1} parent=43 // pred_region
          %p712 = scmp.lt.s32.totalorder %s38, 1
          %s713 = scalar_select %p712, %s38, 1
          %s714 = scalar_lea.vmem %s16, %s713
        $region100: #{jepa_predictor_forward.1} parent=43 // pred_fallthru
          _
      $region44: #{jepa_predictor_forward.1} parent=5 // pred_fallthru
        _
      %p715 = scmp.le.s32.totalorder 1, %s30
      %p716 = scmp.lt.s32.totalorder %s30, 5
      %p717 = pnand %p715, %p716
      %p718 = pneg %p717
      // Predicated region
      $region101: #{jepa_predictor_forward.1} parent=5 // pred_check
        _
      $region102: #{jepa_predictor_forward.1} parent=5 // pred_check_branch
        %720 = sbr.rel (%p717) target = $region104
      $region103: #{jepa_predictor_forward.1} parent=5 // pred_region
        %s721 = ssub.s32 %s30, 1
        %p722 = scmp.lt.s32.totalorder %s39, 1
        %s723 = scalar_select %p722, %s39, 1
        %s724 = smul.addr %s723, 8
        %s725 = scalar_lea.vmem %s0, %s724
        %p726 = pneg %p68
        %p727 = pneg %p65
        %p728 = scmp.lt.s32.totalorder %s39, 1
        %s729 = scalar_select %p728, %s39, 1
        %s730 = smul.addr %s729, 4
        %s731 = scalar_lea.vmem %s1, %s730
        %p732 = pneg %p94
        %p733 = pneg %p91
        %p734 = pneg %p115
        %p735 = pneg %p112
        %p736 = pneg %p136
        %p737 = pneg %p133
        %p738 = pneg %p157
        %p739 = pneg %p154
        %p740 = scmp.lt.s32.totalorder %s40, 1
        %s741 = scalar_select %p740, %s40, 1
        %s742 = scalar_lea.vmem %s5, %s741
        %p743 = pneg %p183
        %p744 = pneg %p180
        %p745 = scmp.lt.s32.totalorder %s40, 1
        %s746 = scalar_select %p745, %s40, 1
        %s747 = scalar_lea.vmem %s6, %s746
        %p748 = pneg %p209
        %p749 = pneg %p206
        %p750 = scmp.lt.s32.totalorder %s40, 1
        %s751 = scalar_select %p750, %s40, 1
        %s752 = smul.addr %s751, 4
        %s753 = smul.addr %s752, 4
        %s754 = scalar_lea.vmem %s7, %s753
        %p755 = pneg %p235
        %p756 = pneg %p232
        %p757 = scmp.lt.s32.totalorder %s40, 1
        %s758 = scalar_select %p757, %s40, 1
        %s759 = smul.addr %s758, 4
        %s760 = smul.addr %s759, 4
        %s761 = scalar_lea.vmem %s8, %s760
        %p762 = pneg %p261
        %p763 = pneg %p258
        %p764 = scmp.lt.s32.totalorder %s40, 1
        %s765 = scalar_select %p764, %s40, 1
        %s766 = smul.addr %s765, 4
        %s767 = smul.addr %s766, 4
        %s768 = scalar_lea.vmem %s9, %s767
        %p769 = pneg %p287
        %p770 = pneg %p284
        %p771 = scmp.lt.s32.totalorder %s40, 1
        %s772 = scalar_select %p771, %s40, 1
        %s773 = scalar_lea.vmem %s10, %s772
        %p774 = pneg %p313
        %p775 = pneg %p310
        %p776 = scmp.lt.s32.totalorder %s40, 1
        %s777 = scalar_select %p776, %s40, 1
        %s778 = scalar_lea.vmem %s11, %s777
        %p779 = pneg %p339
        %p780 = pneg %p336
        %p781 = scmp.lt.s32.totalorder %s40, 1
        %s782 = scalar_select %p781, %s40, 1
        %s783 = scalar_lea.vmem %s12, %s782
        %p784 = pneg %p365
        %p785 = pneg %p362
        %p786 = scmp.lt.s32.totalorder %s40, 1
        %s787 = scalar_select %p786, %s40, 1
        %s788 = smul.addr %s787, 4
        %s789 = smul.addr %s788, 4
        %s790 = scalar_lea.vmem %s13, %s789
        %p791 = pneg %p391
        %p792 = pneg %p388
        %p793 = scmp.lt.s32.totalorder %s40, 1
        %s794 = scalar_select %p793, %s40, 1
        %s795 = scalar_lea.vmem %s14, %s794
        %p796 = pneg %p417
        %p797 = pneg %p414
        %p798 = scmp.lt.s32.totalorder %s40, 1
        %s799 = scalar_select %p798, %s40, 1
        %s800 = smul.addr %s799, 16
        %s801 = smul.addr %s800, 4
        %s802 = scalar_lea.vmem %s15, %s801
        %p803 = pneg %p443
        %p804 = pneg %p440
        %p805 = scmp.lt.s32.totalorder %s40, 1
        %s806 = scalar_select %p805, %s40, 1
        %s807 = scalar_lea.vmem %s16, %s806
        %p808 = pneg %p469
        %p809 = pneg %p466
        %p810 = pneg %p490
        %p811 = pneg %p487
        %p812 = pneg %p511
        %p813 = pneg %p508
        %p814 = pneg %p532
        %p815 = pneg %p529
        %p816 = pneg %p553
        %p817 = pneg %p550
        %p818 = pneg %p579
        %p819 = pneg %p576
        %s820 = sand.u32 %s566, 1
        %s821 = scalar_lea.sflag [#allocation5], %s820
        %s822 = sand.u32 %s566, 1
        %s823 = smul.addr %s822, 4
        %s824 = scalar_lea.vmem [#allocation4], %s823
        %p825 = scmp.lt.s32.totalorder %s39, 1
        %s826 = scalar_select %p825, %s39, 1
        %s827 = smul.addr %s826, 8
        %s828 = scalar_lea.vmem %s0, %s827
        %p829 = scmp.lt.s32.totalorder %s39, 1
        %s830 = scalar_select %p829, %s39, 1
        %s831 = smul.addr %s830, 4
        %s832 = scalar_lea.vmem %s1, %s831
        %p833 = scmp.lt.s32.totalorder %s40, 1
        %s834 = scalar_select %p833, %s40, 1
        %s835 = scalar_lea.vmem %s5, %s834
        %p836 = scmp.lt.s32.totalorder %s40, 1
        %s837 = scalar_select %p836, %s40, 1
        %s838 = scalar_lea.vmem %s6, %s837
        %p839 = scmp.lt.s32.totalorder %s40, 1
        %s840 = scalar_select %p839, %s40, 1
        %s841 = smul.addr %s840, 4
        %s842 = smul.addr %s841, 4
        %s843 = scalar_lea.vmem %s7, %s842
        %p844 = scmp.lt.s32.totalorder %s40, 1
        %s845 = scalar_select %p844, %s40, 1
        %s846 = smul.addr %s845, 4
        %s847 = smul.addr %s846, 4
        %s848 = scalar_lea.vmem %s8, %s847
        %p849 = scmp.lt.s32.totalorder %s40, 1
        %s850 = scalar_select %p849, %s40, 1
        %s851 = smul.addr %s850, 4
        %s852 = smul.addr %s851, 4
        %s853 = scalar_lea.vmem %s9, %s852
        %p854 = scmp.lt.s32.totalorder %s40, 1
        %s855 = scalar_select %p854, %s40, 1
        %s856 = scalar_lea.vmem %s10, %s855
        %p857 = scmp.lt.s32.totalorder %s40, 1
        %s858 = scalar_select %p857, %s40, 1
        %s859 = scalar_lea.vmem %s11, %s858
        %p860 = scmp.lt.s32.totalorder %s40, 1
        %s861 = scalar_select %p860, %s40, 1
        %s862 = scalar_lea.vmem %s12, %s861
        %p863 = scmp.lt.s32.totalorder %s40, 1
        %s864 = scalar_select %p863, %s40, 1
        %s865 = smul.addr %s864, 4
        %s866 = smul.addr %s865, 4
        %s867 = scalar_lea.vmem %s13, %s866
        %p868 = scmp.lt.s32.totalorder %s40, 1
        %s869 = scalar_select %p868, %s40, 1
        %s870 = scalar_lea.vmem %s14, %s869
        %p871 = scmp.lt.s32.totalorder %s40, 1
        %s872 = scalar_select %p871, %s40, 1
        %s873 = smul.addr %s872, 16
        %s874 = smul.addr %s873, 4
        %s875 = scalar_lea.vmem %s15, %s874
        %p876 = scmp.lt.s32.totalorder %s40, 1
        %s877 = scalar_select %p876, %s40, 1
        %s878 = scalar_lea.vmem %s16, %s877
        %p880 = scmp.eq.s32.totalorder %s40, 0
        // Predicated region
        $region105: #{jepa_predictor_forward.1} parent=103 // pred_check
          %p881 = pneg %p880
        $region106: #{jepa_predictor_forward.1} parent=103 // pred_check_branch
          %883 = sbr.rel (%p881) target = $region108
        $region107: #{jepa_predictor_forward.1} parent=103 // pred_region
          %v884 = vld [vmem:[%s828] sm:$0xff]
          %v885 = vpack.c.bf16 %v884, %v884
          %v886 = vld [vmem:[%s2] sm:$0xf]
          %v887 = vld [vmem:[%s2 + $0x4] sm:$0xf]
          %v888 = vld [vmem:[%s2 + $0x8] sm:$0xf]
          %v889 = vld [vmem:[%s3] sm:$0x1]
          %v891 = vlaneseq
          %v892 = vshrl.u32 %v891, 7
          %v893 = vsub.s32 0, %v892
          %v894 = vrot.slane %v889, %v893
          %v899 = vunpack.c.l.b16 %v886
          %v900 = vunpack.c.l.b16 %v887
          %v901 = vunpack.c.l.b16 %v888
          %v902 = vpack.c.b16 %v900, %v899
          %v903 = vpack.c.b16 %v901, %v901
          %vm905 = vcmask 195584
          %v907 = vsel %vm905, %v885, 0
          %vm909 = vcmask 1043456
          %v911 = vsel %vm909, %v903, 0
          %913 = vmatprep.subr.bf16.mxu0 0
          %914 = vmatpush1.bf16.msra.mxu0 %v902
          %915 = vmatprep.subr.bf16.mxu0 0
          %916 = vmatpush1.bf16.msra.mxu0 %v911
          %917 = vmatprep.subr.bf16.mxu0 0
          %918 = vmatpush1.bf16.msra.mxu0 0
          %919 = vmatprep.subr.bf16.mxu0 0
          %920 = vmatpush1.bf16.msra.mxu0 0
          %921 = vmatprep.subr.bf16.mxu0 0
          %922 = vmatpush1.bf16.msra.mxu0 0
          %923 = vmatprep.subr.bf16.mxu0 0
          %924 = vmatpush1.bf16.msra.mxu0 0
          %925 = vmatprep.subr.bf16.mxu0 0
          %926 = vmatpush1.bf16.msra.mxu0 0
          %927 = vmatprep.subr.bf16.mxu0 0
          %928 = vmatpush1.bf16.msra.mxu0 0
          %929 = vmatprep.subr.bf16.mxu0 0
          %930 = vmatpush1.bf16.msra.mxu0 0
          %931 = vmatprep.subr.bf16.mxu0 0
          %932 = vmatpush1.bf16.msra.mxu0 0
          %933 = vmatprep.subr.bf16.mxu0 0
          %934 = vmatpush1.bf16.msra.mxu0 0
          %935 = vmatprep.subr.bf16.mxu0 0
          %936 = vmatpush1.bf16.msra.mxu0 0
          %937 = vmatprep.subr.bf16.mxu0 0
          %938 = vmatpush1.bf16.msra.mxu0 0
          %939 = vmatprep.subr.bf16.mxu0 0
          %940 = vmatpush1.bf16.msra.mxu0 0
          %941 = vmatprep.subr.bf16.mxu0 0
          %942 = vmatpush1.bf16.msra.mxu0 0
          %943 = vmatprep.subr.bf16.mxu0 0
          %944 = vmatpush1.bf16.msra.mxu0 0
          %945 = vmatprep.mubr.bf16.mxu0 0
          %946 = vmatmul.mubr.bf16.gmra.mrb[0].mxu0 %v907
          %v947 = vpop.f32.mrb[0].mxu0
          %v948 = vadd.f32 %v894, %v947
          %v949 = vpop.f32.mrb[0].mxu0
          %v950 = vpop.f32.mrb[0].mxu0
          %v951 = vpop.f32.mrb[0].mxu0
          %952 = vdwg.mxu0
          %v953 = vpack.c.bf16 %v948, %v948
          %vm954 = vcmask 257024
          %955 = vst.msk [vmem:[#allocation2] sm:$0xf] %vm954, %v953
          %v956 = vld [vmem:[%s832] sm:$0xf]
          %v957 = vld [vmem:[%s4] sm:$0x1]
          %v959 = vlaneseq
          %v960 = vshrl.u32 %v959, 7
          %v961 = vsub.s32 0, %v960
          %v962 = vrot.slane %v957, %v961
          %v964 = vadd.f32 %v956, %v962
          %965 = vst.msk [vmem:[#allocation3] sm:$0xf] %vm954, %v964
        $region108: #{jepa_predictor_forward.1} parent=103 // pred_fallthru
          _
        %v966 = vld [vmem:[#allocation3] sm:$0xf]
        %v967 = vld [vmem:[#allocation2] sm:$0xf]
        %v968 = vld [vmem:[%s835] sm:$0x1]
        %v969 = vld [vmem:[%s838] sm:$0x1]
        %vm970 = vcmask 257024
        %v971 = vsel %vm970, %v966, 0.0
        %972 = vadd.xlane.f32.xlu0 %v971
        %v973 = vpop.xlane.xlu0 %972
        %v974 = vrcp.pop 32.0
        %v975 = vmul.f32 %v973, %v974
        %v976 = vsub.f32 %v966, %v975
        %v977 = vmul.f32 %v976, %v976
        %v978 = vsel %vm970, %v977, 0.0
        %979 = vadd.xlane.f32.xlu0 %v978
        %v980 = vpop.xlane.xlu0 %979
        %v981 = vmul.f32 %v980, %v974
        %v982 = vadd.f32 %v981, 1e-05
        %v983 = vrsqrt.pop %v982
        %v984 = vmul.f32 %v976, %v983
        %v986 = vlaneseq
        %v987 = vshrl.u32 %v986, 7
        %v988 = vsub.s32 0, %v987
        %v989 = vrot.slane %v968, %v988
        %v991 = vmul.f32 %v984, %v989
        %v993 = vlaneseq
        %v994 = vshrl.u32 %v993, 7
        %v995 = vsub.s32 0, %v994
        %v996 = vrot.slane %v969, %v995
        %v998 = vadd.f32 %v991, %v996
        %v999 = vpack.c.bf16 %v998, %v998
        %v1000 = vld [vmem:[%s843] sm:$0xf]
        %v1001 = vld [vmem:[%s843 + $0x4] sm:$0xf]
        %v1002 = vld [vmem:[%s843 + $0x8] sm:$0xf]
        %v1003 = vld [vmem:[%s843 + $0xc] sm:$0xf]
        %v1008 = vunpack.c.l.b16 %v1000
        %v1009 = vunpack.c.l.b16 %v1001
        %v1010 = vunpack.c.l.b16 %v1002
        %v1011 = vunpack.c.l.b16 %v1003
        %v1012 = vpack.c.b16 %v1009, %v1008
        %v1013 = vpack.c.b16 %v1011, %v1010
        %vm1016 = vcmask 261120
        %v1018 = vsel %vm1016, %v999, 0
        %1020 = vmatprep.subr.bf16.mxu0 0
        %1021 = vmatpush1.bf16.msra.mxu0 %v1012
        %1022 = vmatprep.subr.bf16.mxu0 0
        %1023 = vmatpush1.bf16.msra.mxu0 %v1013
        %1024 = vmatprep.subr.bf16.mxu0 0
        %1025 = vmatpush1.bf16.msra.mxu0 0
        %1026 = vmatprep.subr.bf16.mxu0 0
        %1027 = vmatpush1.bf16.msra.mxu0 0
        %1028 = vmatprep.subr.bf16.mxu0 0
        %1029 = vmatpush1.bf16.msra.mxu0 0
        %1030 = vmatprep.subr.bf16.mxu0 0
        %1031 = vmatpush1.bf16.msra.mxu0 0
        %1032 = vmatprep.subr.bf16.mxu0 0
        %1033 = vmatpush1.bf16.msra.mxu0 0
        %1034 = vmatprep.subr.bf16.mxu0 0
        %1035 = vmatpush1.bf16.msra.mxu0 0
        %1036 = vmatprep.subr.bf16.mxu0 0
        %1037 = vmatpush1.bf16.msra.mxu0 0
        %1038 = vmatprep.subr.bf16.mxu0 0
        %1039 = vmatpush1.bf16.msra.mxu0 0
        %1040 = vmatprep.subr.bf16.mxu0 0
        %1041 = vmatpush1.bf16.msra.mxu0 0
        %1042 = vmatprep.subr.bf16.mxu0 0
        %1043 = vmatpush1.bf16.msra.mxu0 0
        %1044 = vmatprep.subr.bf16.mxu0 0
        %1045 = vmatpush1.bf16.msra.mxu0 0
        %1046 = vmatprep.subr.bf16.mxu0 0
        %1047 = vmatpush1.bf16.msra.mxu0 0
        %1048 = vmatprep.subr.bf16.mxu0 0
        %1049 = vmatpush1.bf16.msra.mxu0 0
        %1050 = vmatprep.subr.bf16.mxu0 0
        %1051 = vmatpush1.bf16.msra.mxu0 0
        %1052 = vmatprep.mubr.bf16.mxu0 0
        %1053 = vmatmul.mubr.bf16.gmra.mrb[0].mxu0 %v1018
        %v1054 = vpop.f32.mrb[0].mxu0
        %v1055 = vadd.f32 0.0, %v1054
        %v1056 = vpop.f32.mrb[0].mxu0
        %v1057 = vpop.f32.mrb[0].mxu0
        %v1058 = vpop.f32.mrb[0].mxu0
        %1059 = vdwg.mxu0
        %v1060 = vmul.f32 %v1055, 0.35355338
        %v1061 = vld [vmem:[%s848] sm:$0xf]
        %v1062 = vld [vmem:[%s848 + $0x4] sm:$0xf]
        %v1063 = vld [vmem:[%s848 + $0x8] sm:$0xf]
        %v1064 = vld [vmem:[%s848 + $0xc] sm:$0xf]
        %v1069 = vunpack.c.l.b16 %v1061
        %v1070 = vunpack.c.l.b16 %v1062
        %v1071 = vunpack.c.l.b16 %v1063
        %v1072 = vunpack.c.l.b16 %v1064
        %v1073 = vpack.c.b16 %v1070, %v1069
        %v1074 = vpack.c.b16 %v1072, %v1071
        %v1078 = vsel %vm1016, %v967, 0
        %1080 = vmatprep.subr.bf16.mxu0 0
        %1081 = vmatpush1.bf16.msra.mxu0 %v1073
        %1082 = vmatprep.subr.bf16.mxu0 0
        %1083 = vmatpush1.bf16.msra.mxu0 %v1074
        %1084 = vmatprep.subr.bf16.mxu0 0
        %1085 = vmatpush1.bf16.msra.mxu0 0
        %1086 = vmatprep.subr.bf16.mxu0 0
        %1087 = vmatpush1.bf16.msra.mxu0 0
        %1088 = vmatprep.subr.bf16.mxu0 0
        %1089 = vmatpush1.bf16.msra.mxu0 0
        %1090 = vmatprep.subr.bf16.mxu0 0
        %1091 = vmatpush1.bf16.msra.mxu0 0
        %1092 = vmatprep.subr.bf16.mxu0 0
        %1093 = vmatpush1.bf16.msra.mxu0 0
        %1094 = vmatprep.subr.bf16.mxu0 0
        %1095 = vmatpush1.bf16.msra.mxu0 0
        %1096 = vmatprep.subr.bf16.mxu0 0
        %1097 = vmatpush1.bf16.msra.mxu0 0
        %1098 = vmatprep.subr.bf16.mxu0 0
        %1099 = vmatpush1.bf16.msra.mxu0 0
        %1100 = vmatprep.subr.bf16.mxu0 0
        %1101 = vmatpush1.bf16.msra.mxu0 0
        %1102 = vmatprep.subr.bf16.mxu0 0
        %1103 = vmatpush1.bf16.msra.mxu0 0
        %1104 = vmatprep.subr.bf16.mxu0 0
        %1105 = vmatpush1.bf16.msra.mxu0 0
        %1106 = vmatprep.subr.bf16.mxu0 0
        %1107 = vmatpush1.bf16.msra.mxu0 0
        %1108 = vmatprep.subr.bf16.mxu0 0
        %1109 = vmatpush1.bf16.msra.mxu0 0
        %1110 = vmatprep.subr.bf16.mxu0 0
        %1111 = vmatpush1.bf16.msra.mxu0 0
        %1112 = vmatprep.mubr.bf16.mxu0 0
        %1113 = vmatmul.mubr.bf16.gmra.mrb[0].mxu0 %v1078
        %v1114 = vpop.f32.mrb[0].mxu0
        %v1115 = vadd.f32 0.0, %v1114
        %v1116 = vpop.f32.mrb[0].mxu0
        %v1117 = vpop.f32.mrb[0].mxu0
        %v1118 = vpop.f32.mrb[0].mxu0
        %1119 = vdwg.mxu0
        %v1120 = vpack.c.bf16 %v1060, %v1060
        %v1121 = vpack.c.bf16 %v1115, %v1115
        %v1122 = vld [vmem:[%s853] sm:$0xf]
        %v1123 = vld [vmem:[%s853 + $0x4] sm:$0xf]
        %v1124 = vld [vmem:[%s853 + $0x8] sm:$0xf]
        %v1125 = vld [vmem:[%s853 + $0xc] sm:$0xf]
        %vm1126 = vcmask 64512
        %v1128 = vsel %vm1126, %v1120, 0
        %v1131 = vsel %vm1126, %v1121, 0
        %1133 = vmatprep.subr.bf16.mxu0 0
        %1134 = vmatpush1.bf16.xpose.msra.mxu0 %v1131
        %1135 = vmatprep.subr.bf16.mxu0 0
        %1136 = vmatpush1.bf16.xpose.msra.mxu0 0
        %1137 = vmatprep.subr.bf16.mxu0 0
        %1138 = vmatpush1.bf16.xpose.msra.mxu0 0
        %1139 = vmatprep.subr.bf16.mxu0 0
        %1140 = vmatpush1.bf16.xpose.msra.mxu0 0
        %1141 = vmatprep.subr.bf16.mxu0 0
        %1142 = vmatpush1.bf16.xpose.msra.mxu0 0
        %1143 = vmatprep.subr.bf16.mxu0 0
        %1144 = vmatpush1.bf16.xpose.msra.mxu0 0
        %1145 = vmatprep.subr.bf16.mxu0 0
        %1146 = vmatpush1.bf16.xpose.msra.mxu0 0
        %1147 = vmatprep.subr.bf16.mxu0 0
        %1148 = vmatpush1.bf16.xpose.msra.mxu0 0
        %1149 = vmatprep.subr.bf16.mxu0 0
        %1150 = vmatpush1.bf16.xpose.msra.mxu0 0
        %1151 = vmatprep.subr.bf16.mxu0 0
        %1152 = vmatpush1.bf16.xpose.msra.mxu0 0
        %1153 = vmatprep.subr.bf16.mxu0 0
        %1154 = vmatpush1.bf16.xpose.msra.mxu0 0
        %1155 = vmatprep.subr.bf16.mxu0 0
        %1156 = vmatpush1.bf16.xpose.msra.mxu0 0
        %1157 = vmatprep.subr.bf16.mxu0 0
        %1158 = vmatpush1.bf16.xpose.msra.mxu0 0
        %1159 = vmatprep.subr.bf16.mxu0 0
        %1160 = vmatpush1.bf16.xpose.msra.mxu0 0
        %1161 = vmatprep.subr.bf16.mxu0 0
        %1162 = vmatpush1.bf16.xpose.msra.mxu0 0
        %1163 = vmatprep.subr.bf16.mxu0 0
        %1164 = vmatpush1.bf16.xpose.msra.mxu0 0
        %1165 = vmatprep.mubr.bf16.mxu0 0
        %1166 = vmatmul.mubr.bf16.gmra.mrb[0].mxu0 %v1128
        %v1167 = vpop.f32.mrb[0].mxu0
        %v1168 = vadd.f32 0.0, %v1167
        %v1169 = vpop.f32.mrb[0].mxu0
        %v1170 = vpop.f32.mrb[0].mxu0
        %v1171 = vpop.f32.mrb[0].mxu0
        %1172 = vdwg.mxu0
        %vm1173 = vcmask 60416
        %v1174 = vsel %vm1173, %v1168, -inf
        %1175 = vmax.xlane.f32.xlu0 %v1174
        %v1176 = vpop.xlane.xlu0 %1175
        %v1177 = vsub.f32 %v1168, %v1176
        %v1178 = vmul.f32 %v1177, 1.442695
        %v1179 = vpow.pop %v1178
        %v1180 = vsel %vm1173, %v1179, 0.0
        %1181 = vadd.xlane.f32.xlu0 %v1180
        %v1182 = vpop.xlane.xlu0 %1181
        %v1183 = vrcp.pop %v1182
        %v1184 = vmul.f32 %v1179, %v1183
        %v1185 = vpack.c.bf16 %v1184, %v1184
        %1187 = vrot.lane.b32.xlu0 %v1121, 96
        %v1188 = vpop.permute.xlu0 %1187
        %v1190 = vsel %vm1126, %v1185, 0
        %vm1192 = vcmask 1043456
        %v1194 = vsel %vm1192, %v1188, 0
        %1196 = vmatprep.subr.bf16.mxu0 0
        %1197 = vmatpush1.bf16.msra.mxu0 %v1194
        %1198 = vmatprep.subr.bf16.mxu0 0
        %1199 = vmatpush1.bf16.msra.mxu0 0
        %1200 = vmatprep.subr.bf16.mxu0 0
        %1201 = vmatpush1.bf16.msra.mxu0 0
        %1202 = vmatprep.subr.bf16.mxu0 0
        %1203 = vmatpush1.bf16.msra.mxu0 0
        %1204 = vmatprep.subr.bf16.mxu0 0
        %1205 = vmatpush1.bf16.msra.mxu0 0
        %1206 = vmatprep.subr.bf16.mxu0 0
        %1207 = vmatpush1.bf16.msra.mxu0 0
        %1208 = vmatprep.subr.bf16.mxu0 0
        %1209 = vmatpush1.bf16.msra.mxu0 0
        %1210 = vmatprep.subr.bf16.mxu0 0
        %1211 = vmatpush1.bf16.msra.mxu0 0
        %1212 = vmatprep.subr.bf16.mxu0 0
        %1213 = vmatpush1.bf16.msra.mxu0 0
        %1214 = vmatprep.subr.bf16.mxu0 0
        %1215 = vmatpush1.bf16.msra.mxu0 0
        %1216 = vmatprep.subr.bf16.mxu0 0
        %1217 = vmatpush1.bf16.msra.mxu0 0
        %1218 = vmatprep.subr.bf16.mxu0 0
        %1219 = vmatpush1.bf16.msra.mxu0 0
        %1220 = vmatprep.subr.bf16.mxu0 0
        %1221 = vmatpush1.bf16.msra.mxu0 0
        %1222 = vmatprep.subr.bf16.mxu0 0
        %1223 = vmatpush1.bf16.msra.mxu0 0
        %1224 = vmatprep.subr.bf16.mxu0 0
        %1225 = vmatpush1.bf16.msra.mxu0 0
        %1226 = vmatprep.subr.bf16.mxu0 0
        %1227 = vmatpush1.bf16.msra.mxu0 0
        %1228 = vmatprep.mubr.bf16.mxu0 0
        %1229 = vmatmul.mubr.bf16.gmra.mrb[0].mxu0 %v1190
        %v1230 = vpop.f32.mrb[0].mxu0
        %v1231 = vadd.f32 0.0, %v1230
        %v1232 = vpop.f32.mrb[0].mxu0
        %v1233 = vpop.f32.mrb[0].mxu0
        %v1234 = vpop.f32.mrb[0].mxu0
        %1235 = vdwg.mxu0
        %v1236 = vpack.c.bf16 %v1231, %v1231
        %1238 = vrot.lane.b32.xlu0 %v1120, 120
        %v1239 = vpop.permute.xlu0 %1238
        %1240 = vrot.lane.b32.xlu0 %v1121, 120
        %v1241 = vpop.permute.xlu0 %1240
        %v1243 = vsel %vm1126, %v1239, 0
        %v1246 = vsel %vm1126, %v1241, 0
        %1248 = vmatprep.subr.bf16.mxu0 0
        %1249 = vmatpush1.bf16.xpose.msra.mxu0 %v1246
        %1250 = vmatprep.subr.bf16.mxu0 0
        %1251 = vmatpush1.bf16.xpose.msra.mxu0 0
        %1252 = vmatprep.subr.bf16.mxu0 0
        %1253 = vmatpush1.bf16.xpose.msra.mxu0 0
        %1254 = vmatprep.subr.bf16.mxu0 0
        %1255 = vmatpush1.bf16.xpose.msra.mxu0 0
        %1256 = vmatprep.subr.bf16.mxu0 0
        %1257 = vmatpush1.bf16.xpose.msra.mxu0 0
        %1258 = vmatprep.subr.bf16.mxu0 0
        %1259 = vmatpush1.bf16.xpose.msra.mxu0 0
        %1260 = vmatprep.subr.bf16.mxu0 0
        %1261 = vmatpush1.bf16.xpose.msra.mxu0 0
        %1262 = vmatprep.subr.bf16.mxu0 0
        %1263 = vmatpush1.bf16.xpose.msra.mxu0 0
        %1264 = vmatprep.subr.bf16.mxu0 0
        %1265 = vmatpush1.bf16.xpose.msra.mxu0 0
        %1266 = vmatprep.subr.bf16.mxu0 0
        %1267 = vmatpush1.bf16.xpose.msra.mxu0 0
        %1268 = vmatprep.subr.bf16.mxu0 0
        %1269 = vmatpush1.bf16.xpose.msra.mxu0 0
        %1270 = vmatprep.subr.bf16.mxu0 0
        %1271 = vmatpush1.bf16.xpose.msra.mxu0 0
        %1272 = vmatprep.subr.bf16.mxu0 0
        %1273 = vmatpush1.bf16.xpose.msra.mxu0 0
        %1274 = vmatprep.subr.bf16.mxu0 0
        %1275 = vmatpush1.bf16.xpose.msra.mxu0 0
        %1276 = vmatprep.subr.bf16.mxu0 0
        %1277 = vmatpush1.bf16.xpose.msra.mxu0 0
        %1278 = vmatprep.subr.bf16.mxu0 0
        %1279 = vmatpush1.bf16.xpose.msra.mxu0 0
        %1280 = vmatprep.mubr.bf16.mxu0 0
        %1281 = vmatmul.mubr.bf16.gmra.mrb[0].mxu0 %v1243
        %v1282 = vpop.f32.mrb[0].mxu0
        %v1283 = vadd.f32 0.0, %v1282
        %v1284 = vpop.f32.mrb[0].mxu0
        %v1285 = vpop.f32.mrb[0].mxu0
        %v1286 = vpop.f32.mrb[0].mxu0
        %1287 = vdwg.mxu0
        %v1288 = vsel %vm1173, %v1283, -inf
        %1289 = vmax.xlane.f32.xlu0 %v1288
        %v1290 = vpop.xlane.xlu0 %1289
        %v1291 = vsub.f32 %v1283, %v1290
        %v1292 = vmul.f32 %v1291, 1.442695
        %v1293 = vpow.pop %v1292
        %v1294 = vsel %vm1173, %v1293, 0.0
        %1295 = vadd.xlane.f32.xlu0 %v1294
        %v1296 = vpop.xlane.xlu0 %1295
        %v1297 = vrcp.pop %v1296
        %v1298 = vmul.f32 %v1293, %v1297
        %v1299 = vpack.c.bf16 %v1298, %v1298
        %1300 = vrot.lane.b32.xlu0 %v1121, 88
        %v1301 = vpop.permute.xlu0 %1300
        %v1303 = vsel %vm1126, %v1299, 0
        %v1306 = vsel %vm1192, %v1301, 0
        %1308 = vmatprep.subr.bf16.mxu0 0
        %1309 = vmatpush1.bf16.msra.mxu0 %v1306
        %1310 = vmatprep.subr.bf16.mxu0 0
        %1311 = vmatpush1.bf16.msra.mxu0 0
        %1312 = vmatprep.subr.bf16.mxu0 0
        %1313 = vmatpush1.bf16.msra.mxu0 0
        %1314 = vmatprep.subr.bf16.mxu0 0
        %1315 = vmatpush1.bf16.msra.mxu0 0
        %1316 = vmatprep.subr.bf16.mxu0 0
        %1317 = vmatpush1.bf16.msra.mxu0 0
        %1318 = vmatprep.subr.bf16.mxu0 0
        %1319 = vmatpush1.bf16.msra.mxu0 0
        %1320 = vmatprep.subr.bf16.mxu0 0
        %1321 = vmatpush1.bf16.msra.mxu0 0
        %1322 = vmatprep.subr.bf16.mxu0 0
        %1323 = vmatpush1.bf16.msra.mxu0 0
        %1324 = vmatprep.subr.bf16.mxu0 0
        %1325 = vmatpush1.bf16.msra.mxu0 0
        %1326 = vmatprep.subr.bf16.mxu0 0
        %1327 = vmatpush1.bf16.msra.mxu0 0
        %1328 = vmatprep.subr.bf16.mxu0 0
        %1329 = vmatpush1.bf16.msra.mxu0 0
        %1330 = vmatprep.subr.bf16.mxu0 0
        %1331 = vmatpush1.bf16.msra.mxu0 0
        %1332 = vmatprep.subr.bf16.mxu0 0
        %1333 = vmatpush1.bf16.msra.mxu0 0
        %1334 = vmatprep.subr.bf16.mxu0 0
        %1335 = vmatpush1.bf16.msra.mxu0 0
        %1336 = vmatprep.subr.bf16.mxu0 0
        %1337 = vmatpush1.bf16.msra.mxu0 0
        %1338 = vmatprep.subr.bf16.mxu0 0
        %1339 = vmatpush1.bf16.msra.mxu0 0
        %1340 = vmatprep.mubr.bf16.mxu0 0
        %1341 = vmatmul.mubr.bf16.gmra.mrb[0].mxu0 %v1303
        %v1342 = vpop.f32.mrb[0].mxu0
        %v1343 = vadd.f32 0.0, %v1342
        %v1344 = vpop.f32.mrb[0].mxu0
        %v1345 = vpop.f32.mrb[0].mxu0
        %v1346 = vpop.f32.mrb[0].mxu0
        %1347 = vdwg.mxu0
        %v1348 = vpack.c.bf16 %v1343, %v1343
        %v1350 = vsel %vm1126, %v1348, 0
        %v1353 = vsel %vm1192, %v1123, 0
        %1355 = vmatprep.subr.bf16.mxu0 0
        %1356 = vmatpush1.bf16.msra.mxu0 %v1353
        %1357 = vmatprep.subr.bf16.mxu0 0
        %1358 = vmatpush1.bf16.msra.mxu0 0
        %1359 = vmatprep.subr.bf16.mxu0 0
        %1360 = vmatpush1.bf16.msra.mxu0 0
        %1361 = vmatprep.subr.bf16.mxu0 0
        %1362 = vmatpush1.bf16.msra.mxu0 0
        %1363 = vmatprep.subr.bf16.mxu0 0
        %1364 = vmatpush1.bf16.msra.mxu0 0
        %1365 = vmatprep.subr.bf16.mxu0 0
        %1366 = vmatpush1.bf16.msra.mxu0 0
        %1367 = vmatprep.subr.bf16.mxu0 0
        %1368 = vmatpush1.bf16.msra.mxu0 0
        %1369 = vmatprep.subr.bf16.mxu0 0
        %1370 = vmatpush1.bf16.msra.mxu0 0
        %1371 = vmatprep.subr.bf16.mxu0 0
        %1372 = vmatpush1.bf16.msra.mxu0 0
        %1373 = vmatprep.subr.bf16.mxu0 0
        %1374 = vmatpush1.bf16.msra.mxu0 0
        %1375 = vmatprep.subr.bf16.mxu0 0
        %1376 = vmatpush1.bf16.msra.mxu0 0
        %1377 = vmatprep.subr.bf16.mxu0 0
        %1378 = vmatpush1.bf16.msra.mxu0 0
        %1379 = vmatprep.subr.bf16.mxu0 0
        %1380 = vmatpush1.bf16.msra.mxu0 0
        %1381 = vmatprep.subr.bf16.mxu0 0
        %1382 = vmatpush1.bf16.msra.mxu0 0
        %1383 = vmatprep.subr.bf16.mxu0 0
        %1384 = vmatpush1.bf16.msra.mxu0 0
        %1385 = vmatprep.subr.bf16.mxu0 0
        %1386 = vmatpush1.bf16.msra.mxu0 0
        %1387 = vmatprep.mubr.bf16.mxu0 0
        %1388 = vmatmul.mubr.bf16.gmra.mrb[0].mxu0 %v1350
        %v1389 = vpop.f32.mrb[0].mxu0
        %v1390 = vadd.f32 0.0, %v1389
        %v1391 = vpop.f32.mrb[0].mxu0
        %v1392 = vpop.f32.mrb[0].mxu0
        %v1393 = vpop.f32.mrb[0].mxu0
        %1394 = vdwg.mxu0
        %v1396 = vsel %vm1126, %v1236, 0
        %v1399 = vsel %vm1192, %v1122, 0
        %1401 = vmatprep.subr.bf16.mxu0 0
        %1402 = vmatpush1.bf16.msra.mxu0 %v1399
        %1403 = vmatprep.subr.bf16.mxu0 0
        %1404 = vmatpush1.bf16.msra.mxu0 0
        %1405 = vmatprep.subr.bf16.mxu0 0
        %1406 = vmatpush1.bf16.msra.mxu0 0
        %1407 = vmatprep.subr.bf16.mxu0 0
        %1408 = vmatpush1.bf16.msra.mxu0 0
        %1409 = vmatprep.subr.bf16.mxu0 0
        %1410 = vmatpush1.bf16.msra.mxu0 0
        %1411 = vmatprep.subr.bf16.mxu0 0
        %1412 = vmatpush1.bf16.msra.mxu0 0
        %1413 = vmatprep.subr.bf16.mxu0 0
        %1414 = vmatpush1.bf16.msra.mxu0 0
        %1415 = vmatprep.subr.bf16.mxu0 0
        %1416 = vmatpush1.bf16.msra.mxu0 0
        %1417 = vmatprep.subr.bf16.mxu0 0
        %1418 = vmatpush1.bf16.msra.mxu0 0
        %1419 = vmatprep.subr.bf16.mxu0 0
        %1420 = vmatpush1.bf16.msra.mxu0 0
        %1421 = vmatprep.subr.bf16.mxu0 0
        %1422 = vmatpush1.bf16.msra.mxu0 0
        %1423 = vmatprep.subr.bf16.mxu0 0
        %1424 = vmatpush1.bf16.msra.mxu0 0
        %1425 = vmatprep.subr.bf16.mxu0 0
        %1426 = vmatpush1.bf16.msra.mxu0 0
        %1427 = vmatprep.subr.bf16.mxu0 0
        %1428 = vmatpush1.bf16.msra.mxu0 0
        %1429 = vmatprep.subr.bf16.mxu0 0
        %1430 = vmatpush1.bf16.msra.mxu0 0
        %1431 = vmatprep.subr.bf16.mxu0 0
        %1432 = vmatpush1.bf16.msra.mxu0 0
        %1433 = vmatprep.mubr.bf16.mxu0 0
        %1434 = vmatmul.mubr.bf16.gmra.mrb[0].mxu0 %v1396
        %v1435 = vpop.f32.mrb[0].mxu0
        %v1436 = vadd.f32 %v1390, %v1435
        %v1437 = vpop.f32.mrb[0].mxu0
        %v1438 = vpop.f32.mrb[0].mxu0
        %v1439 = vpop.f32.mrb[0].mxu0
        %1440 = vdwg.mxu0
        %1441 = vrot.lane.b32.xlu0 %v1120, 112
        %v1442 = vpop.permute.xlu0 %1441
        %1443 = vrot.lane.b32.xlu0 %v1121, 112
        %v1444 = vpop.permute.xlu0 %1443
        %v1446 = vsel %vm1126, %v1442, 0
        %v1449 = vsel %vm1126, %v1444, 0
        %1451 = vmatprep.subr.bf16.mxu0 0
        %1452 = vmatpush1.bf16.xpose.msra.mxu0 %v1449
        %1453 = vmatprep.subr.bf16.mxu0 0
        %1454 = vmatpush1.bf16.xpose.msra.mxu0 0
        %1455 = vmatprep.subr.bf16.mxu0 0
        %1456 = vmatpush1.bf16.xpose.msra.mxu0 0
        %1457 = vmatprep.subr.bf16.mxu0 0
        %1458 = vmatpush1.bf16.xpose.msra.mxu0 0
        %1459 = vmatprep.subr.bf16.mxu0 0
        %1460 = vmatpush1.bf16.xpose.msra.mxu0 0
        %1461 = vmatprep.subr.bf16.mxu0 0
        %1462 = vmatpush1.bf16.xpose.msra.mxu0 0
        %1463 = vmatprep.subr.bf16.mxu0 0
        %1464 = vmatpush1.bf16.xpose.msra.mxu0 0
        %1465 = vmatprep.subr.bf16.mxu0 0
        %1466 = vmatpush1.bf16.xpose.msra.mxu0 0
        %1467 = vmatprep.subr.bf16.mxu0 0
        %1468 = vmatpush1.bf16.xpose.msra.mxu0 0
        %1469 = vmatprep.subr.bf16.mxu0 0
        %1470 = vmatpush1.bf16.xpose.msra.mxu0 0
        %1471 = vmatprep.subr.bf16.mxu0 0
        %1472 = vmatpush1.bf16.xpose.msra.mxu0 0
        %1473 = vmatprep.subr.bf16.mxu0 0
        %1474 = vmatpush1.bf16.xpose.msra.mxu0 0
        %1475 = vmatprep.subr.bf16.mxu0 0
        %1476 = vmatpush1.bf16.xpose.msra.mxu0 0
        %1477 = vmatprep.subr.bf16.mxu0 0
        %1478 = vmatpush1.bf16.xpose.msra.mxu0 0
        %1479 = vmatprep.subr.bf16.mxu0 0
        %1480 = vmatpush1.bf16.xpose.msra.mxu0 0
        %1481 = vmatprep.subr.bf16.mxu0 0
        %1482 = vmatpush1.bf16.xpose.msra.mxu0 0
        %1483 = vmatprep.mubr.bf16.mxu0 0
        %1484 = vmatmul.mubr.bf16.gmra.mrb[0].mxu0 %v1446
        %v1485 = vpop.f32.mrb[0].mxu0
        %v1486 = vadd.f32 0.0, %v1485
        %v1487 = vpop.f32.mrb[0].mxu0
        %v1488 = vpop.f32.mrb[0].mxu0
        %v1489 = vpop.f32.mrb[0].mxu0
        %1490 = vdwg.mxu0
        %v1491 = vsel %vm1173, %v1486, -inf
        %1492 = vmax.xlane.f32.xlu0 %v1491
        %v1493 = vpop.xlane.xlu0 %1492
        %v1494 = vsub.f32 %v1486, %v1493
        %v1495 = vmul.f32 %v1494, 1.442695
        %v1496 = vpow.pop %v1495
        %v1497 = vsel %vm1173, %v1496, 0.0
        %1498 = vadd.xlane.f32.xlu0 %v1497
        %v1499 = vpop.xlane.xlu0 %1498
        %v1500 = vrcp.pop %v1499
        %v1501 = vmul.f32 %v1496, %v1500
        %v1502 = vpack.c.bf16 %v1501, %v1501
        %1503 = vrot.lane.b32.xlu0 %v1121, 80
        %v1504 = vpop.permute.xlu0 %1503
        %v1506 = vsel %vm1126, %v1502, 0
        %v1509 = vsel %vm1192, %v1504, 0
        %1511 = vmatprep.subr.bf16.mxu0 0
        %1512 = vmatpush1.bf16.msra.mxu0 %v1509
        %1513 = vmatprep.subr.bf16.mxu0 0
        %1514 = vmatpush1.bf16.msra.mxu0 0
        %1515 = vmatprep.subr.bf16.mxu0 0
        %1516 = vmatpush1.bf16.msra.mxu0 0
        %1517 = vmatprep.subr.bf16.mxu0 0
        %1518 = vmatpush1.bf16.msra.mxu0 0
        %1519 = vmatprep.subr.bf16.mxu0 0
        %1520 = vmatpush1.bf16.msra.mxu0 0
        %1521 = vmatprep.subr.bf16.mxu0 0
        %1522 = vmatpush1.bf16.msra.mxu0 0
        %1523 = vmatprep.subr.bf16.mxu0 0
        %1524 = vmatpush1.bf16.msra.mxu0 0
        %1525 = vmatprep.subr.bf16.mxu0 0
        %1526 = vmatpush1.bf16.msra.mxu0 0
        %1527 = vmatprep.subr.bf16.mxu0 0
        %1528 = vmatpush1.bf16.msra.mxu0 0
        %1529 = vmatprep.subr.bf16.mxu0 0
        %1530 = vmatpush1.bf16.msra.mxu0 0
        %1531 = vmatprep.subr.bf16.mxu0 0
        %1532 = vmatpush1.bf16.msra.mxu0 0
        %1533 = vmatprep.subr.bf16.mxu0 0
        %1534 = vmatpush1.bf16.msra.mxu0 0
        %1535 = vmatprep.subr.bf16.mxu0 0
        %1536 = vmatpush1.bf16.msra.mxu0 0
        %1537 = vmatprep.subr.bf16.mxu0 0
        %1538 = vmatpush1.bf16.msra.mxu0 0
        %1539 = vmatprep.subr.bf16.mxu0 0
        %1540 = vmatpush1.bf16.msra.mxu0 0
        %1541 = vmatprep.subr.bf16.mxu0 0
        %1542 = vmatpush1.bf16.msra.mxu0 0
        %1543 = vmatprep.mubr.bf16.mxu0 0
        %1544 = vmatmul.mubr.bf16.gmra.mrb[0].mxu0 %v1506
        %v1545 = vpop.f32.mrb[0].mxu0
        %v1546 = vadd.f32 0.0, %v1545
        %v1547 = vpop.f32.mrb[0].mxu0
        %v1548 = vpop.f32.mrb[0].mxu0
        %v1549 = vpop.f32.mrb[0].mxu0
        %1550 = vdwg.mxu0
        %v1551 = vpack.c.bf16 %v1546, %v1546
        %v1553 = vsel %vm1126, %v1551, 0
        %v1556 = vsel %vm1192, %v1124, 0
        %1558 = vmatprep.subr.bf16.mxu0 0
        %1559 = vmatpush1.bf16.msra.mxu0 %v1556
        %1560 = vmatprep.subr.bf16.mxu0 0
        %1561 = vmatpush1.bf16.msra.mxu0 0
        %1562 = vmatprep.subr.bf16.mxu0 0
        %1563 = vmatpush1.bf16.msra.mxu0 0
        %1564 = vmatprep.subr.bf16.mxu0 0
        %1565 = vmatpush1.bf16.msra.mxu0 0
        %1566 = vmatprep.subr.bf16.mxu0 0
        %1567 = vmatpush1.bf16.msra.mxu0 0
        %1568 = vmatprep.subr.bf16.mxu0 0
        %1569 = vmatpush1.bf16.msra.mxu0 0
        %1570 = vmatprep.subr.bf16.mxu0 0
        %1571 = vmatpush1.bf16.msra.mxu0 0
        %1572 = vmatprep.subr.bf16.mxu0 0
        %1573 = vmatpush1.bf16.msra.mxu0 0
        %1574 = vmatprep.subr.bf16.mxu0 0
        %1575 = vmatpush1.bf16.msra.mxu0 0
        %1576 = vmatprep.subr.bf16.mxu0 0
        %1577 = vmatpush1.bf16.msra.mxu0 0
        %1578 = vmatprep.subr.bf16.mxu0 0
        %1579 = vmatpush1.bf16.msra.mxu0 0
        %1580 = vmatprep.subr.bf16.mxu0 0
        %1581 = vmatpush1.bf16.msra.mxu0 0
        %1582 = vmatprep.subr.bf16.mxu0 0
        %1583 = vmatpush1.bf16.msra.mxu0 0
        %1584 = vmatprep.subr.bf16.mxu0 0
        %1585 = vmatpush1.bf16.msra.mxu0 0
        %1586 = vmatprep.subr.bf16.mxu0 0
        %1587 = vmatpush1.bf16.msra.mxu0 0
        %1588 = vmatprep.subr.bf16.mxu0 0
        %1589 = vmatpush1.bf16.msra.mxu0 0
        %1590 = vmatprep.mubr.bf16.mxu0 0
        %1591 = vmatmul.mubr.bf16.gmra.mrb[0].mxu0 %v1553
        %v1592 = vpop.f32.mrb[0].mxu0
        %v1593 = vadd.f32 0.0, %v1592
        %v1594 = vpop.f32.mrb[0].mxu0
        %v1595 = vpop.f32.mrb[0].mxu0
        %v1596 = vpop.f32.mrb[0].mxu0
        %1597 = vdwg.mxu0
        %v1598 = vadd.f32 %v1436, %v1593
        %1599 = vrot.lane.b32.xlu0 %v1120, 104
        %v1600 = vpop.permute.xlu0 %1599
        %1601 = vrot.lane.b32.xlu0 %v1121, 104
        %v1602 = vpop.permute.xlu0 %1601
        %v1604 = vsel %vm1126, %v1600, 0
        %v1607 = vsel %vm1126, %v1602, 0
        %1609 = vmatprep.subr.bf16.mxu0 0
        %1610 = vmatpush1.bf16.xpose.msra.mxu0 %v1607
        %1611 = vmatprep.subr.bf16.mxu0 0
        %1612 = vmatpush1.bf16.xpose.msra.mxu0 0
        %1613 = vmatprep.subr.bf16.mxu0 0
        %1614 = vmatpush1.bf16.xpose.msra.mxu0 0
        %1615 = vmatprep.subr.bf16.mxu0 0
        %1616 = vmatpush1.bf16.xpose.msra.mxu0 0
        %1617 = vmatprep.subr.bf16.mxu0 0
        %1618 = vmatpush1.bf16.xpose.msra.mxu0 0
        %1619 = vmatprep.subr.bf16.mxu0 0
        %1620 = vmatpush1.bf16.xpose.msra.mxu0 0
        %1621 = vmatprep.subr.bf16.mxu0 0
        %1622 = vmatpush1.bf16.xpose.msra.mxu0 0
        %1623 = vmatprep.subr.bf16.mxu0 0
        %1624 = vmatpush1.bf16.xpose.msra.mxu0 0
        %1625 = vmatprep.subr.bf16.mxu0 0
        %1626 = vmatpush1.bf16.xpose.msra.mxu0 0
        %1627 = vmatprep.subr.bf16.mxu0 0
        %1628 = vmatpush1.bf16.xpose.msra.mxu0 0
        %1629 = vmatprep.subr.bf16.mxu0 0
        %1630 = vmatpush1.bf16.xpose.msra.mxu0 0
        %1631 = vmatprep.subr.bf16.mxu0 0
        %1632 = vmatpush1.bf16.xpose.msra.mxu0 0
        %1633 = vmatprep.subr.bf16.mxu0 0
        %1634 = vmatpush1.bf16.xpose.msra.mxu0 0
        %1635 = vmatprep.subr.bf16.mxu0 0
        %1636 = vmatpush1.bf16.xpose.msra.mxu0 0
        %1637 = vmatprep.subr.bf16.mxu0 0
        %1638 = vmatpush1.bf16.xpose.msra.mxu0 0
        %1639 = vmatprep.subr.bf16.mxu0 0
        %1640 = vmatpush1.bf16.xpose.msra.mxu0 0
        %1641 = vmatprep.mubr.bf16.mxu0 0
        %1642 = vmatmul.mubr.bf16.gmra.mrb[0].mxu0 %v1604
        %v1643 = vpop.f32.mrb[0].mxu0
        %v1644 = vadd.f32 0.0, %v1643
        %v1645 = vpop.f32.mrb[0].mxu0
        %v1646 = vpop.f32.mrb[0].mxu0
        %v1647 = vpop.f32.mrb[0].mxu0
        %1648 = vdwg.mxu0
        %v1649 = vsel %vm1173, %v1644, -inf
        %1650 = vmax.xlane.f32.xlu0 %v1649
        %v1651 = vpop.xlane.xlu0 %1650
        %v1652 = vsub.f32 %v1644, %v1651
        %v1653 = vmul.f32 %v1652, 1.442695
        %v1654 = vpow.pop %v1653
        %v1655 = vsel %vm1173, %v1654, 0.0
        %1656 = vadd.xlane.f32.xlu0 %v1655
        %v1657 = vpop.xlane.xlu0 %1656
        %v1658 = vrcp.pop %v1657
        %v1659 = vmul.f32 %v1654, %v1658
        %v1660 = vpack.c.bf16 %v1659, %v1659
        %1661 = vrot.lane.b32.xlu0 %v1121, 72
        %v1662 = vpop.permute.xlu0 %1661
        %v1664 = vsel %vm1126, %v1660, 0
        %v1667 = vsel %vm1192, %v1662, 0
        %1669 = vmatprep.subr.bf16.mxu0 0
        %1670 = vmatpush1.bf16.msra.mxu0 %v1667
        %1671 = vmatprep.subr.bf16.mxu0 0
        %1672 = vmatpush1.bf16.msra.mxu0 0
        %1673 = vmatprep.subr.bf16.mxu0 0
        %1674 = vmatpush1.bf16.msra.mxu0 0
        %1675 = vmatprep.subr.bf16.mxu0 0
        %1676 = vmatpush1.bf16.msra.mxu0 0
        %1677 = vmatprep.subr.bf16.mxu0 0
        %1678 = vmatpush1.bf16.msra.mxu0 0
        %1679 = vmatprep.subr.bf16.mxu0 0
        %1680 = vmatpush1.bf16.msra.mxu0 0
        %1681 = vmatprep.subr.bf16.mxu0 0
        %1682 = vmatpush1.bf16.msra.mxu0 0
        %1683 = vmatprep.subr.bf16.mxu0 0
        %1684 = vmatpush1.bf16.msra.mxu0 0
        %1685 = vmatprep.subr.bf16.mxu0 0
        %1686 = vmatpush1.bf16.msra.mxu0 0
        %1687 = vmatprep.subr.bf16.mxu0 0
        %1688 = vmatpush1.bf16.msra.mxu0 0
        %1689 = vmatprep.subr.bf16.mxu0 0
        %1690 = vmatpush1.bf16.msra.mxu0 0
        %1691 = vmatprep.subr.bf16.mxu0 0
        %1692 = vmatpush1.bf16.msra.mxu0 0
        %1693 = vmatprep.subr.bf16.mxu0 0
        %1694 = vmatpush1.bf16.msra.mxu0 0
        %1695 = vmatprep.subr.bf16.mxu0 0
        %1696 = vmatpush1.bf16.msra.mxu0 0
        %1697 = vmatprep.subr.bf16.mxu0 0
        %1698 = vmatpush1.bf16.msra.mxu0 0
        %1699 = vmatprep.subr.bf16.mxu0 0
        %1700 = vmatpush1.bf16.msra.mxu0 0
        %1701 = vmatprep.mubr.bf16.mxu0 0
        %1702 = vmatmul.mubr.bf16.gmra.mrb[0].mxu0 %v1664
        %v1703 = vpop.f32.mrb[0].mxu0
        %v1704 = vadd.f32 0.0, %v1703
        %v1705 = vpop.f32.mrb[0].mxu0
        %v1706 = vpop.f32.mrb[0].mxu0
        %v1707 = vpop.f32.mrb[0].mxu0
        %1708 = vdwg.mxu0
        %v1709 = vpack.c.bf16 %v1704, %v1704
        %v1711 = vsel %vm1126, %v1709, 0
        %v1714 = vsel %vm1192, %v1125, 0
        %1716 = vmatprep.subr.bf16.mxu0 0
        %1717 = vmatpush1.bf16.msra.mxu0 %v1714
        %1718 = vmatprep.subr.bf16.mxu0 0
        %1719 = vmatpush1.bf16.msra.mxu0 0
        %1720 = vmatprep.subr.bf16.mxu0 0
        %1721 = vmatpush1.bf16.msra.mxu0 0
        %1722 = vmatprep.subr.bf16.mxu0 0
        %1723 = vmatpush1.bf16.msra.mxu0 0
        %1724 = vmatprep.subr.bf16.mxu0 0
        %1725 = vmatpush1.bf16.msra.mxu0 0
        %1726 = vmatprep.subr.bf16.mxu0 0
        %1727 = vmatpush1.bf16.msra.mxu0 0
        %1728 = vmatprep.subr.bf16.mxu0 0
        %1729 = vmatpush1.bf16.msra.mxu0 0
        %1730 = vmatprep.subr.bf16.mxu0 0
        %1731 = vmatpush1.bf16.msra.mxu0 0
        %1732 = vmatprep.subr.bf16.mxu0 0
        %1733 = vmatpush1.bf16.msra.mxu0 0
        %1734 = vmatprep.subr.bf16.mxu0 0
        %1735 = vmatpush1.bf16.msra.mxu0 0
        %1736 = vmatprep.subr.bf16.mxu0 0
        %1737 = vmatpush1.bf16.msra.mxu0 0
        %1738 = vmatprep.subr.bf16.mxu0 0
        %1739 = vmatpush1.bf16.msra.mxu0 0
        %1740 = vmatprep.subr.bf16.mxu0 0
        %1741 = vmatpush1.bf16.msra.mxu0 0
        %1742 = vmatprep.subr.bf16.mxu0 0
        %1743 = vmatpush1.bf16.msra.mxu0 0
        %1744 = vmatprep.subr.bf16.mxu0 0
        %1745 = vmatpush1.bf16.msra.mxu0 0
        %1746 = vmatprep.subr.bf16.mxu0 0
        %1747 = vmatpush1.bf16.msra.mxu0 0
        %1748 = vmatprep.mubr.bf16.mxu0 0
        %1749 = vmatmul.mubr.bf16.gmra.mrb[0].mxu0 %v1711
        %v1750 = vpop.f32.mrb[0].mxu0
        %v1751 = vadd.f32 0.0, %v1750
        %v1752 = vpop.f32.mrb[0].mxu0
        %v1753 = vpop.f32.mrb[0].mxu0
        %v1754 = vpop.f32.mrb[0].mxu0
        %1755 = vdwg.mxu0
        %v1756 = vadd.f32 %v1598, %v1751
        %v1757 = vadd.f32 %v966, %v1756
        %v1758 = vld [vmem:[%s856] sm:$0x1]
        %v1760 = vlaneseq
        %v1761 = vshrl.u32 %v1760, 7
        %v1762 = vsub.s32 0, %v1761
        %v1763 = vrot.slane %v1758, %v1762
        %v1765 = vadd.f32 %v1757, %v1763
        %v1766 = vld [vmem:[%s859] sm:$0x1]
        %v1767 = vld [vmem:[%s862] sm:$0x1]
        %v1768 = vsel %vm970, %v1765, 0.0
        %1769 = vadd.xlane.f32.xlu0 %v1768
        %v1770 = vpop.xlane.xlu0 %1769
        %v1771 = vmul.f32 %v1770, %v974
        %v1772 = vsub.f32 %v1765, %v1771
        %v1773 = vmul.f32 %v1772, %v1772
        %v1774 = vsel %vm970, %v1773, 0.0
        %1775 = vadd.xlane.f32.xlu0 %v1774
        %v1776 = vpop.xlane.xlu0 %1775
        %v1777 = vmul.f32 %v1776, %v974
        %v1778 = vadd.f32 %v1777, 1e-05
        %v1779 = vrsqrt.pop %v1778
        %v1780 = vmul.f32 %v1772, %v1779
        %v1782 = vlaneseq
        %v1783 = vshrl.u32 %v1782, 7
        %v1784 = vsub.s32 0, %v1783
        %v1785 = vrot.slane %v1766, %v1784
        %v1787 = vmul.f32 %v1780, %v1785
        %v1789 = vlaneseq
        %v1790 = vshrl.u32 %v1789, 7
        %v1791 = vsub.s32 0, %v1790
        %v1792 = vrot.slane %v1767, %v1791
        %v1794 = vadd.f32 %v1787, %v1792
        %v1795 = vpack.c.bf16 %v1794, %v1794
        %v1796 = vld [vmem:[%s867] sm:$0xf]
        %v1797 = vld [vmem:[%s867 + $0x4] sm:$0xf]
        %v1798 = vld [vmem:[%s867 + $0x8] sm:$0xf]
        %v1799 = vld [vmem:[%s867 + $0xc] sm:$0xf]
        %v1800 = vld [vmem:[%s870] sm:$0x1]
        %v1802 = vlaneseq
        %v1803 = vshrl.u32 %v1802, 7
        %v1804 = vsub.s32 0, %v1803
        %v1805 = vrot.slane %v1800, %v1804
        %v1811 = vunpack.c.l.b16 %v1796
        %v1812 = vunpack.c.l.b16 %v1797
        %v1813 = vunpack.c.l.b16 %v1798
        %v1814 = vunpack.c.l.b16 %v1799
        %v1815 = vpack.c.b16 %v1812, %v1811
        %v1816 = vpack.c.b16 %v1814, %v1813
        %v1820 = vsel %vm1016, %v1795, 0
        %1822 = vmatprep.subr.bf16.mxu0 0
        %1823 = vmatpush1.bf16.msra.mxu0 %v1815
        %1824 = vmatprep.subr.bf16.mxu0 0
        %1825 = vmatpush1.bf16.msra.mxu0 %v1816
        %1826 = vmatprep.subr.bf16.mxu0 0
        %1827 = vmatpush1.bf16.msra.mxu0 0
        %1828 = vmatprep.subr.bf16.mxu0 0
        %1829 = vmatpush1.bf16.msra.mxu0 0
        %1830 = vmatprep.subr.bf16.mxu0 0
        %1831 = vmatpush1.bf16.msra.mxu0 0
        %1832 = vmatprep.subr.bf16.mxu0 0
        %1833 = vmatpush1.bf16.msra.mxu0 0
        %1834 = vmatprep.subr.bf16.mxu0 0
        %1835 = vmatpush1.bf16.msra.mxu0 0
        %1836 = vmatprep.subr.bf16.mxu0 0
        %1837 = vmatpush1.bf16.msra.mxu0 0
        %1838 = vmatprep.subr.bf16.mxu0 0
        %1839 = vmatpush1.bf16.msra.mxu0 0
        %1840 = vmatprep.subr.bf16.mxu0 0
        %1841 = vmatpush1.bf16.msra.mxu0 0
        %1842 = vmatprep.subr.bf16.mxu0 0
        %1843 = vmatpush1.bf16.msra.mxu0 0
        %1844 = vmatprep.subr.bf16.mxu0 0
        %1845 = vmatpush1.bf16.msra.mxu0 0
        %1846 = vmatprep.subr.bf16.mxu0 0
        %1847 = vmatpush1.bf16.msra.mxu0 0
        %1848 = vmatprep.subr.bf16.mxu0 0
        %1849 = vmatpush1.bf16.msra.mxu0 0
        %1850 = vmatprep.subr.bf16.mxu0 0
        %1851 = vmatpush1.bf16.msra.mxu0 0
        %1852 = vmatprep.subr.bf16.mxu0 0
        %1853 = vmatpush1.bf16.msra.mxu0 0
        %1854 = vmatprep.mubr.bf16.mxu0 0
        %1855 = vmatmul.mubr.bf16.gmra.mrb[0].mxu0 %v1820
        %v1856 = vpop.f32.mrb[0].mxu0
        %v1857 = vadd.f32 %v1805, %v1856
        %v1858 = vpop.f32.mrb[0].mxu0
        %v1859 = vpop.f32.mrb[0].mxu0
        %v1860 = vpop.f32.mrb[0].mxu0
        %1861 = vdwg.mxu0
        %v1862 = vmul.f32 %v1857, 0.5
        %v1863 = vmul.f32 %v1857, 0.70710677
        %v1864 = vand.u32 2147483647, %v1863
        %v1865 = vmul.f32 %v1864, 0.3275911
        %v1866 = vadd.f32 %v1865, 1.0
        %v1867 = vrcp.pop %v1866
        %v1868 = vmul.f32 1.0, %v1867
        %v1869 = vmul.f32 %v1868, 1.0614054
        %v1870 = vadd.f32 %v1869, -1.4531521
        %v1871 = vmul.f32 %v1870, %v1868
        %v1872 = vadd.f32 %v1871, 1.4214138
        %v1873 = vmul.f32 %v1872, %v1868
        %v1874 = vadd.f32 %v1873, -0.28449672
        %v1875 = vmul.f32 %v1874, %v1868
        %v1876 = vadd.f32 %v1875, 0.2548296
        %v1877 = vmul.f32 %v1876, %v1868
        %v1878 = vsub.f32 0.0, %v1864
        %v1879 = vmul.f32 %v1878, %v1864
        %v1880 = vmul.f32 %v1879, 1.442695
        %v1881 = vpow.pop %v1880
        %v1882 = vmul.f32 %v1877, %v1881
        %v1883 = vsub.f32 1.0, %v1882
        %vm1884 = vcmp.ge.f32.partialorder %v1863, 0.0
        %v1885 = vsub.f32 0.0, %v1883
        %v1886 = vsel %vm1884, %v1883, %v1885
        %v1887 = vadd.f32 %v1886, 1.0
        %v1888 = vmul.f32 %v1862, %v1887
        %v1889 = vpack.c.bf16 %v1888, %v1888
        %v1890 = vld [vmem:[%s875] sm:$0xf]
        %v1891 = vld [vmem:[%s875 + $0x4] sm:$0xf]
        %v1892 = vld [vmem:[%s875 + $0x8] sm:$0xf]
        %v1893 = vld [vmem:[%s875 + $0xc] sm:$0xf]
        %v1894 = vld [vmem:[%s875 + $0x10] sm:$0xf]
        %v1895 = vld [vmem:[%s875 + $0x14] sm:$0xf]
        %v1896 = vld [vmem:[%s875 + $0x18] sm:$0xf]
        %v1897 = vld [vmem:[%s875 + $0x1c] sm:$0xf]
        %v1898 = vld [vmem:[%s875 + $0x20] sm:$0xf]
        %v1899 = vld [vmem:[%s875 + $0x24] sm:$0xf]
        %v1900 = vld [vmem:[%s875 + $0x28] sm:$0xf]
        %v1901 = vld [vmem:[%s875 + $0x2c] sm:$0xf]
        %v1902 = vld [vmem:[%s875 + $0x30] sm:$0xf]
        %v1903 = vld [vmem:[%s875 + $0x34] sm:$0xf]
        %v1904 = vld [vmem:[%s875 + $0x38] sm:$0xf]
        %v1905 = vld [vmem:[%s875 + $0x3c] sm:$0xf]
        %v1922 = vunpack.c.l.b16 %v1890
        %v1923 = vunpack.c.l.b16 %v1891
        %v1924 = vunpack.c.l.b16 %v1892
        %v1925 = vunpack.c.l.b16 %v1893
        %v1926 = vunpack.c.l.b16 %v1894
        %v1927 = vunpack.c.l.b16 %v1895
        %v1928 = vunpack.c.l.b16 %v1896
        %v1929 = vunpack.c.l.b16 %v1897
        %v1930 = vunpack.c.l.b16 %v1898
        %v1931 = vunpack.c.l.b16 %v1899
        %v1932 = vunpack.c.l.b16 %v1900
        %v1933 = vunpack.c.l.b16 %v1901
        %v1934 = vunpack.c.l.b16 %v1902
        %v1935 = vunpack.c.l.b16 %v1903
        %v1936 = vunpack.c.l.b16 %v1904
        %v1937 = vunpack.c.l.b16 %v1905
        %v1938 = vpack.c.b16 %v1923, %v1922
        %v1939 = vpack.c.b16 %v1925, %v1924
        %v1940 = vpack.c.b16 %v1927, %v1926
        %v1941 = vpack.c.b16 %v1929, %v1928
        %v1942 = vpack.c.b16 %v1931, %v1930
        %v1943 = vpack.c.b16 %v1933, %v1932
        %v1944 = vpack.c.b16 %v1935, %v1934
        %v1945 = vpack.c.b16 %v1937, %v1936
        %1954 = vmatprep.subr.bf16.mxu0 0
        %1955 = vmatpush1.bf16.msra.mxu0 %v1938
        %1956 = vmatprep.subr.bf16.mxu0 0
        %1957 = vmatpush1.bf16.msra.mxu0 %v1939
        %1958 = vmatprep.subr.bf16.mxu0 0
        %1959 = vmatpush1.bf16.msra.mxu0 %v1940
        %1960 = vmatprep.subr.bf16.mxu0 0
        %1961 = vmatpush1.bf16.msra.mxu0 %v1941
        %1962 = vmatprep.subr.bf16.mxu0 0
        %1963 = vmatpush1.bf16.msra.mxu0 %v1942
        %1964 = vmatprep.subr.bf16.mxu0 0
        %1965 = vmatpush1.bf16.msra.mxu0 %v1943
        %1966 = vmatprep.subr.bf16.mxu0 0
        %1967 = vmatpush1.bf16.msra.mxu0 %v1944
        %1968 = vmatprep.subr.bf16.mxu0 0
        %1969 = vmatpush1.bf16.msra.mxu0 %v1945
        %1970 = vmatprep.subr.bf16.mxu0 0
        %1971 = vmatpush1.bf16.msra.mxu0 0
        %1972 = vmatprep.subr.bf16.mxu0 0
        %1973 = vmatpush1.bf16.msra.mxu0 0
        %1974 = vmatprep.subr.bf16.mxu0 0
        %1975 = vmatpush1.bf16.msra.mxu0 0
        %1976 = vmatprep.subr.bf16.mxu0 0
        %1977 = vmatpush1.bf16.msra.mxu0 0
        %1978 = vmatprep.subr.bf16.mxu0 0
        %1979 = vmatpush1.bf16.msra.mxu0 0
        %1980 = vmatprep.subr.bf16.mxu0 0
        %1981 = vmatpush1.bf16.msra.mxu0 0
        %1982 = vmatprep.subr.bf16.mxu0 0
        %1983 = vmatpush1.bf16.msra.mxu0 0
        %1984 = vmatprep.subr.bf16.mxu0 0
        %1985 = vmatpush1.bf16.msra.mxu0 0
        %1986 = vmatprep.mubr.bf16.mxu0 0
        %1987 = vmatmul.mubr.bf16.gmra.mrb[0].mxu0 %v1889
        %v1988 = vpop.f32.mrb[0].mxu0
        %v1989 = vadd.f32 0.0, %v1988
        %v1990 = vpop.f32.mrb[0].mxu0
        %v1991 = vpop.f32.mrb[0].mxu0
        %v1992 = vpop.f32.mrb[0].mxu0
        %1993 = vdwg.mxu0
        %v1994 = vadd.f32 %v1765, %v1989
        %v1995 = vld [vmem:[%s878] sm:$0x1]
        %v1997 = vlaneseq
        %v1998 = vshrl.u32 %v1997, 7
        %v1999 = vsub.s32 0, %v1998
        %v2000 = vrot.slane %v1995, %v1999
        %v2002 = vadd.f32 %v1994, %v2000
        %2003 = vst.msk [vmem:[#allocation3] sm:$0xf] %vm970, %v2002
        %p2004 = scmp.eq.s32.totalorder %s40, 1
        // Predicated region
        $region109: #{jepa_predictor_forward.1} parent=103 // pred_check
          %p2005 = pneg %p2004
        $region110: #{jepa_predictor_forward.1} parent=103 // pred_check_branch
          %2007 = sbr.rel (%p2005) target = $region112
        $region111: #{jepa_predictor_forward.1} parent=103 // pred_region
          %v2008 = vld [vmem:[%s17] sm:$0x1]
          %v2009 = vld [vmem:[%s18] sm:$0x1]
          %v2010 = vsel %vm970, %v2002, 0.0
          %2011 = vadd.xlane.f32.xlu0 %v2010
          %v2012 = vpop.xlane.xlu0 %2011
          %v2013 = vmul.f32 %v2012, %v974
          %v2014 = vsub.f32 %v2002, %v2013
          %v2015 = vmul.f32 %v2014, %v2014
          %v2016 = vsel %vm970, %v2015, 0.0
          %2017 = vadd.xlane.f32.xlu0 %v2016
          %v2018 = vpop.xlane.xlu0 %2017
          %v2019 = vmul.f32 %v2018, %v974
          %v2020 = vadd.f32 %v2019, 1e-05
          %v2021 = vrsqrt.pop %v2020
          %v2022 = vmul.f32 %v2014, %v2021
          %v2024 = vlaneseq
          %v2025 = vshrl.u32 %v2024, 7
          %v2026 = vsub.s32 0, %v2025
          %v2027 = vrot.slane %v2008, %v2026
          %v2029 = vmul.f32 %v2022, %v2027
          %v2031 = vlaneseq
          %v2032 = vshrl.u32 %v2031, 7
          %v2033 = vsub.s32 0, %v2032
          %v2034 = vrot.slane %v2009, %v2033
          %v2036 = vadd.f32 %v2029, %v2034
          %v2037 = vpack.c.bf16 %v2036, %v2036
          %v2038 = vld [vmem:[%s19] sm:$0xf]
          %v2039 = vld [vmem:[%s19 + $0x4] sm:$0xf]
          %v2040 = vld [vmem:[%s19 + $0x8] sm:$0xf]
          %v2041 = vld [vmem:[%s19 + $0xc] sm:$0xf]
          %v2042 = vld [vmem:[%s20] sm:$0x1]
          %v2044 = vlaneseq
          %v2045 = vshrl.u32 %v2044, 7
          %v2046 = vsub.s32 0, %v2045
          %v2047 = vrot.slane %v2042, %v2046
          %v2053 = vunpack.c.l.b16 %v2038
          %v2054 = vunpack.c.l.b16 %v2039
          %v2055 = vunpack.c.l.b16 %v2040
          %v2056 = vunpack.c.l.b16 %v2041
          %v2057 = vpack.c.b16 %v2054, %v2053
          %v2058 = vpack.c.b16 %v2056, %v2055
          %v2062 = vsel %vm1016, %v2037, 0
          %2064 = vmatprep.subr.bf16.mxu0 0
          %2065 = vmatpush1.bf16.msra.mxu0 %v2057
          %2066 = vmatprep.subr.bf16.mxu0 0
          %2067 = vmatpush1.bf16.msra.mxu0 %v2058
          %2068 = vmatprep.subr.bf16.mxu0 0
          %2069 = vmatpush1.bf16.msra.mxu0 0
          %2070 = vmatprep.subr.bf16.mxu0 0
          %2071 = vmatpush1.bf16.msra.mxu0 0
          %2072 = vmatprep.subr.bf16.mxu0 0
          %2073 = vmatpush1.bf16.msra.mxu0 0
          %2074 = vmatprep.subr.bf16.mxu0 0
          %2075 = vmatpush1.bf16.msra.mxu0 0
          %2076 = vmatprep.subr.bf16.mxu0 0
          %2077 = vmatpush1.bf16.msra.mxu0 0
          %2078 = vmatprep.subr.bf16.mxu0 0
          %2079 = vmatpush1.bf16.msra.mxu0 0
          %2080 = vmatprep.subr.bf16.mxu0 0
          %2081 = vmatpush1.bf16.msra.mxu0 0
          %2082 = vmatprep.subr.bf16.mxu0 0
          %2083 = vmatpush1.bf16.msra.mxu0 0
          %2084 = vmatprep.subr.bf16.mxu0 0
          %2085 = vmatpush1.bf16.msra.mxu0 0
          %2086 = vmatprep.subr.bf16.mxu0 0
          %2087 = vmatpush1.bf16.msra.mxu0 0
          %2088 = vmatprep.subr.bf16.mxu0 0
          %2089 = vmatpush1.bf16.msra.mxu0 0
          %2090 = vmatprep.subr.bf16.mxu0 0
          %2091 = vmatpush1.bf16.msra.mxu0 0
          %2092 = vmatprep.subr.bf16.mxu0 0
          %2093 = vmatpush1.bf16.msra.mxu0 0
          %2094 = vmatprep.subr.bf16.mxu0 0
          %2095 = vmatpush1.bf16.msra.mxu0 0
          %2096 = vmatprep.mubr.bf16.mxu0 0
          %2097 = vmatmul.mubr.bf16.gmra.mrb[0].mxu0 %v2062
          %v2098 = vpop.f32.mrb[0].mxu0
          %v2099 = vadd.f32 %v2047, %v2098
          %v2100 = vpop.f32.mrb[0].mxu0
          %v2101 = vpop.f32.mrb[0].mxu0
          %v2102 = vpop.f32.mrb[0].mxu0
          %2103 = vdwg.mxu0
          %2104 = vst [vmem:[%s824] sm:$0xf] %v2099
        $region112: #{jepa_predictor_forward.1} parent=103 // pred_fallthru
          _
        %s2105 = sand.u32 %s566, 1
        %s2106 = scalar_lea.sflag [#allocation5], %s2105
        %s2107 = sand.u32 %s566, 1
        %s2108 = smul.addr %s2107, 4
        %s2109 = scalar_lea.vmem [#allocation4], %s2108
        // Predicated region
        $region113: #{jepa_predictor_forward.1} parent=103 // pred_check
          %p2110 = pneg %p576
        $region114: #{jepa_predictor_forward.1} parent=103 // pred_check_branch
          %2112 = sbr.rel (%p2110) target = $region116
        $region115: #{jepa_predictor_forward.1} parent=103 // pred_region
          %s2114 = ssub.s32 64, 64
          %2115 = vsyncadd %s2106, %s2114
          %s2116 = smul.addr %s39, 64
          %s2117 = scalar_lea.hbm %s21, %s2116
          %s2119 = sshll.u32 %s2109, 4
          %s2120 = int_to_ptr.vmem [resolvable:$true] %s2119
          %2122 = dma.vmem_to_hbm [thread:$0]  %s2120, 64, %s2117, %s2106
        $region116: #{jepa_predictor_forward.1} parent=103 // pred_fallthru
          _
      $region104: #{jepa_predictor_forward.1} parent=5 // pred_fallthru
        _
      %p2123 = scmp.le.s32.totalorder 2, %s30
      // Predicated region
      $region117: #{jepa_predictor_forward.1} parent=5 // pred_check
        %p2124 = pneg %p2123
      $region118: #{jepa_predictor_forward.1} parent=5 // pred_check_branch
        %2126 = sbr.rel (%p2124) target = $region120
      $region119: #{jepa_predictor_forward.1} parent=5 // pred_region
        %s2127 = ssub.s32 %s30, 2
        // Predicated region
        $region121: #{jepa_predictor_forward.1} parent=119 // pred_check
          %p2128 = pneg %p582
        $region122: #{jepa_predictor_forward.1} parent=119 // pred_check_branch
          %2130 = sbr.rel (%p2128) target = $region124
        $region123: #{jepa_predictor_forward.1} parent=119 // pred_region
          %s2131 = sand.u32 %s567, 1
          %s2132 = scalar_lea.sflag [#allocation5], %s2131
          %s2133 = sand.u32 %s567, 1
          %s2134 = smul.addr %s2133, 4
          %s2135 = scalar_lea.vmem [#allocation4], %s2134
          %2136 = dma.done %s2132, 64
        $region124: #{jepa_predictor_forward.1} parent=119 // pred_fallthru
          _
      $region120: #{jepa_predictor_forward.1} parent=5 // pred_fallthru
        _
    $region6: #{jepa_predictor_forward.1} parent=1 // loop_footer
      %s34 = sadd.s32 1, %s30
    $region7: #{jepa_predictor_forward.1} parent=1 // loop_footer_branch
      %29 = sbr.rel target = $region3
    $region8: #{jepa_predictor_forward.1} parent=1 // loop_exit
      _
    %2137 = vsyncpa [#allocation5], 1
    %s2138 = scalar_lea.sflag [#allocation5], 1
    %2139 = vsyncpa %s2138, 1

</llo_original>
